<compile_context>
chip_gen: v5e
topology: v5e:2x2
jax: 0.10.0
libtpu: 0.0.40
codegen_flags: <defaults>
</compile_context>

<pallas_src>
import functools

import jax
import jax.numpy as jnp
from jax.experimental import pallas as pl
from jax.experimental.pallas import tpu as pltpu

LEAKY_SLOPE = 0.01      # torch.nn.functional.leaky_relu default
NEG_INF = -1e9


def _lrelu(x):
    return jnp.where(x > 0, x, LEAKY_SLOPE * x)


# --------------------------------------------------------------------------
# Single fused kernel: FC_N, FC_E and all message-passing + GRU layers, for
# one graph of the batch (grid axis = graph index).
# --------------------------------------------------------------------------
def _fused_forward_kernel(node_ref, edge_ref, uvi_ref, inc_ref, mask_ref,
                          wn_ref, bn_ref, we_ref, be_ref,
                          wmae_ref, bmae_ref, wg_ref, bg_ref,
                          h_out_ref, e_out_ref,
                          *, n_layers, H, HE, C, E):
    f32 = jnp.float32
    bf16 = jnp.bfloat16

    def mm(a, b):
        # bf16 MXU matmul with f32 accumulation (astype is a no-op if already bf16).
        return jnp.dot(a.astype(bf16), b.astype(bf16), preferred_element_type=f32)

    # ---- initial projections (FC_N / FC_E) + LeakyReLU ----
    h = _lrelu(mm(node_ref[...], wn_ref[...]) + bn_ref[...])     # [N, H]  f32
    e = _lrelu(mm(edge_ref[...], we_ref[...]) + be_ref[...])     # [E, HE] f32
    h_bf = h.astype(bf16)                                        # bf16 shadow
    n_nodes = h.shape[0]

    # In-kernel one-hot gather matrix: rows 0..E-1 pick node us[j], rows E..2E-1
    # pick node vs[j].  Replaces node_features[us]/[vs] with one MXU pass.
    col = jax.lax.broadcasted_iota(jnp.int32, (2 * E, n_nodes), 1)
    UV = jnp.where(uvi_ref[...] == col, 1.0, 0.0).astype(bf16)   # [2E, N]

    inc = inc_ref[...]     # [N, E] f32  node-edge incidence matrix
    msk = mask_ref[...]    # [N, E] f32  additive -1e9 mask

    for layer in range(n_layers):
        # -- fused endpoint gathers: ONE pass instead of two --
        hu_hv = mm(UV, h_bf)                                     # [2E, H] f32
        hu = hu_hv[:E]
        hv = hu_hv[E:]

        # -- uve lane-concat (3H = 96 <= 128) + ONE fused projection --
        # columns of W_mae = [messages | new edges | attn logit | pad]
        uve = jnp.concatenate([hu, hv, e], axis=1).astype(bf16)  # [E, 3H]
        mae = mm(uve, wmae_ref[layer]) + bmae_ref[layer]         # [E, MAE_OUT] f32

        m = _lrelu(mae[:, :C])                                   # [E, C]
        e_new = _lrelu(mae[:, C:C + HE])                         # [E, HE]
        a_row = mae[:, C + HE:C + HE + 1].T                      # [1, E] logits

        # -- per-node masked softmax over incident edges (torch semantics:
        #    softmax(node_edge_matrix * a^T + node_edge_mask, dim=1)) --
        logits = inc * a_row + msk                               # [N, E]
        logits = logits - jnp.max(logits, axis=1, keepdims=True) # per-node max
        p = jnp.exp(logits)
        att = p / jnp.sum(p, axis=1, keepdims=True)              # exact softmax
        ctx = mm(att, m)                                         # [N, C]

        # -- GRUCell(ctx, h): ONE fused matmul, cols = [r | z | n_ih | n_hh] --
        g = mm(jnp.concatenate([ctx, h], axis=1), wg_ref[layer]) + bg_ref[layer]
        r = jax.nn.sigmoid(g[:, :H])
        z = jax.nn.sigmoid(g[:, H:2 * H])
        n = jnp.tanh(g[:, 2 * H:3 * H] + r * g[:, 3 * H:4 * H])
        h = (1.0 - z) * n + z * h
        if layer != n_layers - 1:
            h = jnp.maximum(h, 0.0)                              # inter-layer ReLU
        h_bf = h.astype(bf16)
        e = e_new

    # single writeback at the end
    h_out_ref[...] = h
    e_out_ref[...] = e


# --------------------------------------------------------------------------
# Parameter construction (deterministic, synthetic, pre-fused)
# --------------------------------------------------------------------------
def _mat(key, shape, scale=0.1):
    return (scale * jax.random.normal(key, shape)).astype(jnp.float32)


def init_params(key, n_dim, e_dim, q_dim, layers=4):
    H = HE = C = q_dim
    in_uve = 2 * H + HE                      # pos_dim == 0
    mae_used = C + HE + 1                    # [messages | new edges | attn logit]
    mae_out = max(128, mae_used)             # pad fused projection to 128 lanes
    keys = iter(jax.random.split(key, 24))

    # fused message / new-edge / attention weights, stacked over layers
    w_mae = jnp.zeros((layers, in_uve, mae_out), jnp.float32)
    w_mae = w_mae.at[:, :, :mae_used].set(_mat(next(keys), (layers, in_uve, mae_used)))
    b_mae = jnp.zeros((layers, 1, mae_out), jnp.float32)
    b_mae = b_mae.at[:, :, :mae_used].set(_mat(next(keys), (layers, 1, mae_used)))

    # GRUCell weights fused into one [C+H, 4H] matmul per layer.
    # cols: [r | z | n_ih | n_hh];  rows: [ctx-block (C) | h-block (H)].
    W_ir = _mat(next(keys), (layers, C, H)); W_hr = _mat(next(keys), (layers, H, H))
    W_iz = _mat(next(keys), (layers, C, H)); W_hz = _mat(next(keys), (layers, H, H))
    W_in = _mat(next(keys), (layers, C, H)); W_hn = _mat(next(keys), (layers, H, H))
    b_ir = _mat(next(keys), (layers, 1, H)); b_hr = _mat(next(keys), (layers, 1, H))
    b_iz = _mat(next(keys), (layers, 1, H)); b_hz = _mat(next(keys), (layers, 1, H))
    b_in = _mat(next(keys), (layers, 1, H)); b_hn = _mat(next(keys), (layers, 1, H))

    w_gru = jnp.zeros((layers, C + H, 4 * H), jnp.float32)
    w_gru = w_gru.at[:, :C, 0 * H:1 * H].set(W_ir).at[:, C:, 0 * H:1 * H].set(W_hr)
    w_gru = w_gru.at[:, :C, 1 * H:2 * H].set(W_iz).at[:, C:, 1 * H:2 * H].set(W_hz)
    w_gru = w_gru.at[:, :C, 2 * H:3 * H].set(W_in)     # n gate, input part
    w_gru = w_gru.at[:, C:, 3 * H:4 * H].set(W_hn)     # n gate, hidden part
    b_gru = jnp.concatenate([b_ir + b_hr, b_iz + b_hz, b_in, b_hn], axis=-1)

    params = {
        "W_N": _mat(next(keys), (n_dim, H)).astype(jnp.bfloat16),
        "b_N": _mat(next(keys), (1, H)),
        "W_E": _mat(next(keys), (e_dim, HE)).astype(jnp.bfloat16),
        "b_E": _mat(next(keys), (1, HE)),
        "W_mae": w_mae.astype(jnp.bfloat16),   # [L, 3H, 128]
        "b_mae": b_mae,                        # [L, 1, 128]
        "W_gru": w_gru.astype(jnp.bfloat16),   # [L, C+H, 4H]
        "b_gru": b_gru,                        # [L, 1, 4H]
    }
    dims = {"H": H, "HE": HE, "C": C, "layers": layers, "mae_out": mae_out}
    return params, dims


# --------------------------------------------------------------------------
# Forward pass (mirrors MPNNPositionProducer.forward, vmapped over B graphs
# that share a common padded (N, E); B = 1 recovers the original call).
# --------------------------------------------------------------------------
def mpnn_position_producer_forward(params, dims, node_features, edge_features,
                                   us, vs, matrix_mask_tuple):
    node_edge_matrix, node_edge_mask = matrix_mask_tuple[2], matrix_mask_tuple[3]

    B, N, n_dim = node_features.shape
    _, E, e_dim = edge_features.shape
    us = jnp.asarray(us, jnp.int32).reshape(B, E)
    vs = jnp.asarray(vs, jnp.int32).reshape(B, E)
    assert edge_features.shape[1] == us.shape[1] == vs.shape[1]

    # endpoint indices, [B, 2E, 1]: rows 0..E-1 are us, rows E..2E-1 are vs.
    uv_idx = jnp.concatenate([us, vs], axis=1)[:, :, None]

    H, HE, C = dims["H"], dims["HE"], dims["C"]
    layers, mae_out = dims["layers"], dims["mae_out"]

    kernel = functools.partial(_fused_forward_kernel,
                               n_layers=layers, H=H, HE=HE, C=C, E=E)

    inputs = (node_features.astype(jnp.float32),
              edge_features.astype(jnp.float32),
              uv_idx,
              node_edge_matrix.astype(jnp.float32),
              node_edge_mask.astype(jnp.float32),
              params["W_N"], params["b_N"], params["W_E"], params["b_E"],
              params["W_mae"], params["b_mae"],
              params["W_gru"], params["b_gru"])

    per_graph = lambda b: (b, 0, 0)          # noqa: E731
    const2 = lambda b: (0, 0)                # noqa: E731
    const3 = lambda b: (0, 0, 0)             # noqa: E731
    in_specs = [
        pl.BlockSpec((None, N, n_dim), per_graph),
        pl.BlockSpec((None, E, e_dim), per_graph),
        pl.BlockSpec((None, 2 * E, 1), per_graph),
        pl.BlockSpec((None, N, E), per_graph),
        pl.BlockSpec((None, N, E), per_graph),
        pl.BlockSpec((n_dim, H), const2),
        pl.BlockSpec((1, H), const2),
        pl.BlockSpec((e_dim, HE), const2),
        pl.BlockSpec((1, HE), const2),
        pl.BlockSpec((layers, 3 * H, mae_out), const3),
        pl.BlockSpec((layers, 1, mae_out), const3),
        pl.BlockSpec((layers, C + H, 4 * H), const3),
        pl.BlockSpec((layers, 1, 4 * H), const3),
    ]
    out_specs = (pl.BlockSpec((None, N, H), per_graph),
                 pl.BlockSpec((None, E, HE), per_graph))
    out_shapes = (jax.ShapeDtypeStruct((B, N, H), jnp.float32),
                  jax.ShapeDtypeStruct((B, E, HE), jnp.float32))

    # advisory cost estimate (MXU flops + transcendentals + DMA bytes)
    flops_layer = 2 * ((2 * E) * N * H + E * (3 * H) * mae_out
                       + N * E * C + N * (C + H) * (4 * H))
    flops = B * (2 * (N * n_dim * H + E * e_dim * HE) + layers * flops_layer)
    transcendentals = B * layers * (N * E + 3 * N * H)
    bytes_accessed = (sum(int(x.size) * x.dtype.itemsize for x in inputs)
                      + B * (N * H + E * HE) * 4)

    final_h, _final_e = pl.pallas_call(
        kernel,
        out_shape=out_shapes,
        grid=(B,),
        in_specs=in_specs,
        out_specs=out_specs,
        compiler_params=pltpu.CompilerParams(
            dimension_semantics=("parallel",)),   # graphs split across v7x TCs
        cost_estimate=pl.CostEstimate(flops=flops,
                                      transcendentals=transcendentals,
                                      bytes_accessed=bytes_accessed),
    )(*inputs)

    final_p = final_q = final_h
    return final_p, final_q, 0, 0, None, None


# --------------------------------------------------------------------------
if __name__ == "__main__":
    key = jax.random.PRNGKey(0)
    k_param, k_node, k_edge, k_us, k_vs = jax.random.split(key, 5)

    # Small per-graph shapes consistent with the module; B graphs per call.
    n_dim, e_dim = 16, 8
    config = {"PQ_DIM": 32, "DROPOUT": 0.0}
    B, N, E = 8, 8, 16           # E a multiple of 8 -> sublane-aligned slices

    params, dims = init_params(k_param, n_dim, e_dim, config["PQ_DIM"], layers=4)

    node_features = jax.random.normal(k_node, (B, N, n_dim), dtype=jnp.float32)
    edge_features = jax.random.normal(k_edge, (B, E, e_dim), dtype=jnp.float32)
    us = jax.random.randint(k_us, (B, E), 0, N)
    vs = jax.random.randint(k_vs, (B, E), 0, N)

    # node_edge incidence matrix [B, N, E] (edge j delivers to node vs[j]) and
    # the additive -1e9 softmax mask, exactly as the torch caller would build.
    mat = jnp.swapaxes(jax.nn.one_hot(vs, N, dtype=jnp.float32), 1, 2)  # [B,N,E]
    mask = jnp.where(mat > 0, 0.0, NEG_INF).astype(jnp.float32)
    matrix_mask_tuple = (None, None, mat, mask)

    out = mpnn_position_producer_forward(params, dims, node_features,
                                         edge_features, us, vs,
                                         matrix_mask_tuple)
    final_p, final_q = out[0], out[1]
    jax.block_until_ready(final_p)
    jax.block_until_ready(final_q)
    assert final_p.shape == (B, N, config["PQ_DIM"])
    assert final_q.shape == (B, N, config["PQ_DIM"])
    assert bool(jnp.all(jnp.isfinite(final_p)))
    print("KERNEL_OK")
</pallas_src>

<mosaic_0001>
module attributes {stable_mosaic.version = 11 : i64} {
  func.func @_fused_forward_kernel(%arg0: i32, %arg1: memref<1x8x16xf32, #tpu.memory_space<vmem>>, %arg2: memref<1x16x8xf32, #tpu.memory_space<vmem>>, %arg3: memref<1x32x1xi32, #tpu.memory_space<vmem>>, %arg4: memref<1x8x16xf32, #tpu.memory_space<vmem>>, %arg5: memref<1x8x16xf32, #tpu.memory_space<vmem>>, %arg6: memref<16x32xbf16, #tpu.memory_space<vmem>>, %arg7: memref<1x32xf32, #tpu.memory_space<vmem>>, %arg8: memref<8x32xbf16, #tpu.memory_space<vmem>>, %arg9: memref<1x32xf32, #tpu.memory_space<vmem>>, %arg10: memref<4x96x128xbf16, #tpu.memory_space<vmem>>, %arg11: memref<4x1x128xf32, #tpu.memory_space<vmem>>, %arg12: memref<4x64x128xbf16, #tpu.memory_space<vmem>>, %arg13: memref<4x1x128xf32, #tpu.memory_space<vmem>>, %arg14: memref<1x8x32xf32, #tpu.memory_space<vmem>>, %arg15: memref<1x16x32xf32, #tpu.memory_space<vmem>>) attributes {dimension_semantics = [#tpu.dimension_semantics<parallel>], iteration_bounds = array<i64: 8>, scalar_prefetch = 0 : i64, scratch_operands = 0 : i64, tpu.core_type = #tpu.core_type<tc>, window_params = [{transform_indices = @transform_0, window_bounds = array<i64: 1, 8, 16>}, {transform_indices = @transform_1, window_bounds = array<i64: 1, 16, 8>}, {transform_indices = @transform_2, window_bounds = array<i64: 1, 32, 1>}, {transform_indices = @transform_3, window_bounds = array<i64: 1, 8, 16>}, {transform_indices = @transform_4, window_bounds = array<i64: 1, 8, 16>}, {pipeline_mode = #tpu.pipeline_mode<synchronous>, transform_indices = @transform_5, window_bounds = array<i64: 16, 32>}, {pipeline_mode = #tpu.pipeline_mode<synchronous>, transform_indices = @transform_6, window_bounds = array<i64: 1, 32>}, {pipeline_mode = #tpu.pipeline_mode<synchronous>, transform_indices = @transform_7, window_bounds = array<i64: 8, 32>}, {pipeline_mode = #tpu.pipeline_mode<synchronous>, transform_indices = @transform_8, window_bounds = array<i64: 1, 32>}, {pipeline_mode = #tpu.pipeline_mode<synchronous>, transform_indices = @transform_9, window_bounds = array<i64: 4, 96, 128>}, {pipeline_mode = #tpu.pipeline_mode<synchronous>, transform_indices = @transform_10, window_bounds = array<i64: 4, 1, 128>}, {pipeline_mode = #tpu.pipeline_mode<synchronous>, transform_indices = @transform_11, window_bounds = array<i64: 4, 64, 128>}, {pipeline_mode = #tpu.pipeline_mode<synchronous>, transform_indices = @transform_12, window_bounds = array<i64: 4, 1, 128>}, {transform_indices = @transform_13, window_bounds = array<i64: 1, 8, 32>}, {transform_indices = @transform_14, window_bounds = array<i64: 1, 16, 32>}]} {
    %c0 = arith.constant 0 : index
    %c0_0 = arith.constant 0 : index
    %c0_1 = arith.constant 0 : index
    %0 = vector.load %arg1[%c0, %c0_0, %c0_1] : memref<1x8x16xf32, #tpu.memory_space<vmem>>, vector<1x8x16xf32>
    %1 = vector.shape_cast %0 : vector<1x8x16xf32> to vector<8x16xf32>
    %c0_2 = arith.constant 0 : index
    %c0_3 = arith.constant 0 : index
    %2 = vector.load %arg6[%c0_2, %c0_3] : memref<16x32xbf16, #tpu.memory_space<vmem>>, vector<16x32xbf16>
    %3 = arith.truncf %1 : vector<8x16xf32> to vector<8x16xbf16>
    %cst = arith.constant dense<0.000000e+00> : vector<8x32xf32>
    %4 = tpu.matmul %3, %2, %cst {dimension_numbers = #tpu.dot_dimension_numbers<[1], [0], [0], [1], [0, 0, 1, 1], [], []>} : vector<8x16xbf16>, vector<16x32xbf16>, vector<8x32xf32> -> vector<8x32xf32>
    %c0_4 = arith.constant 0 : index
    %c0_5 = arith.constant 0 : index
    %5 = vector.load %arg7[%c0_4, %c0_5] : memref<1x32xf32, #tpu.memory_space<vmem>>, vector<1x32xf32>
    %6 = vector.broadcast %5 : vector<1x32xf32> to vector<8x32xf32>
    %7 = arith.addf %4, %6 : vector<8x32xf32>
    %cst_6 = arith.constant 0.000000e+00 : f32
    %8 = vector.broadcast %cst_6 : f32 to vector<8x32xf32>
    %9 = arith.cmpf ogt, %7, %8 : vector<8x32xf32>
    %cst_7 = arith.constant 0.00999999977 : f32
    %10 = vector.broadcast %cst_7 : f32 to vector<8x32xf32>
    %11 = arith.mulf %10, %7 : vector<8x32xf32>
    %12 = arith.select %9, %7, %11 : vector<8x32xi1>, vector<8x32xf32>
    %c0_8 = arith.constant 0 : index
    %c0_9 = arith.constant 0 : index
    %c0_10 = arith.constant 0 : index
    %13 = vector.load %arg2[%c0_8, %c0_9, %c0_10] : memref<1x16x8xf32, #tpu.memory_space<vmem>>, vector<1x16x8xf32>
    %14 = vector.shape_cast %13 : vector<1x16x8xf32> to vector<16x8xf32>
    %c0_11 = arith.constant 0 : index
    %c0_12 = arith.constant 0 : index
    %15 = vector.load %arg8[%c0_11, %c0_12] : memref<8x32xbf16, #tpu.memory_space<vmem>>, vector<8x32xbf16>
    %16 = arith.truncf %14 : vector<16x8xf32> to vector<16x8xbf16>
    %cst_13 = arith.constant dense<0.000000e+00> : vector<16x32xf32>
    %17 = tpu.matmul %16, %15, %cst_13 {dimension_numbers = #tpu.dot_dimension_numbers<[1], [0], [0], [1], [0, 0, 1, 1], [], []>} : vector<16x8xbf16>, vector<8x32xbf16>, vector<16x32xf32> -> vector<16x32xf32>
    %c0_14 = arith.constant 0 : index
    %c0_15 = arith.constant 0 : index
    %18 = vector.load %arg9[%c0_14, %c0_15] : memref<1x32xf32, #tpu.memory_space<vmem>>, vector<1x32xf32>
    %19 = vector.broadcast %18 : vector<1x32xf32> to vector<16x32xf32>
    %20 = arith.addf %17, %19 : vector<16x32xf32>
    %cst_16 = arith.constant 0.000000e+00 : f32
    %21 = vector.broadcast %cst_16 : f32 to vector<16x32xf32>
    %22 = arith.cmpf ogt, %20, %21 : vector<16x32xf32>
    %cst_17 = arith.constant 0.00999999977 : f32
    %23 = vector.broadcast %cst_17 : f32 to vector<16x32xf32>
    %24 = arith.mulf %23, %20 : vector<16x32xf32>
    %25 = arith.select %22, %20, %24 : vector<16x32xi1>, vector<16x32xf32>
    %26 = arith.truncf %12 : vector<8x32xf32> to vector<8x32xbf16>
    %27 = tpu.iota {dimensions = array<i32: 1>} : vector<32x8xi32>
    %c0_18 = arith.constant 0 : index
    %c0_19 = arith.constant 0 : index
    %c0_20 = arith.constant 0 : index
    %28 = vector.load %arg3[%c0_18, %c0_19, %c0_20] : memref<1x32x1xi32, #tpu.memory_space<vmem>>, vector<1x32x1xi32>
    %29 = vector.shape_cast %28 : vector<1x32x1xi32> to vector<32x1xi32>
    %30 = vector.broadcast %29 : vector<32x1xi32> to vector<32x8xi32>
    %31 = arith.cmpi eq, %30, %27 : vector<32x8xi32>
    %cst_21 = arith.constant 1.000000e+00 : f32
    %cst_22 = arith.constant 0.000000e+00 : f32
    %32 = vector.broadcast %cst_21 : f32 to vector<32x8xf32>
    %33 = vector.broadcast %cst_22 : f32 to vector<32x8xf32>
    %34 = arith.select %31, %32, %33 : vector<32x8xi1>, vector<32x8xf32>
    %35 = arith.truncf %34 : vector<32x8xf32> to vector<32x8xbf16>
    %c0_23 = arith.constant 0 : index
    %c0_24 = arith.constant 0 : index
    %c0_25 = arith.constant 0 : index
    %36 = vector.load %arg4[%c0_23, %c0_24, %c0_25] : memref<1x8x16xf32, #tpu.memory_space<vmem>>, vector<1x8x16xf32>
    %37 = vector.shape_cast %36 : vector<1x8x16xf32> to vector<8x16xf32>
    %c0_26 = arith.constant 0 : index
    %c0_27 = arith.constant 0 : index
    %c0_28 = arith.constant 0 : index
    %38 = vector.load %arg5[%c0_26, %c0_27, %c0_28] : memref<1x8x16xf32, #tpu.memory_space<vmem>>, vector<1x8x16xf32>
    %39 = vector.shape_cast %38 : vector<1x8x16xf32> to vector<8x16xf32>
    %cst_29 = arith.constant dense<0.000000e+00> : vector<32x32xf32>
    %40 = tpu.matmul %35, %26, %cst_29 {dimension_numbers = #tpu.dot_dimension_numbers<[1], [0], [0], [1], [0, 0, 1, 1], [], []>} : vector<32x8xbf16>, vector<8x32xbf16>, vector<32x32xf32> -> vector<32x32xf32>
    %41 = vector.extract_strided_slice %40 {offsets = [0, 0], sizes = [16, 32], strides = [1, 1]} : vector<32x32xf32> to vector<16x32xf32>
    %42 = vector.extract_strided_slice %40 {offsets = [16, 0], sizes = [16, 32], strides = [1, 1]} : vector<32x32xf32> to vector<16x32xf32>
    %43 = tpu.concatenate %41, %42, %25 in 1 : vector<16x32xf32>, vector<16x32xf32>, vector<16x32xf32> -> vector<16x96xf32>
    %44 = arith.truncf %43 : vector<16x96xf32> to vector<16x96xbf16>
    %c0_30 = arith.constant 0 : index
    %c0_31 = arith.constant 0 : index
    %c0_32 = arith.constant 0 : index
    %45 = vector.load %arg10[%c0_30, %c0_31, %c0_32] : memref<4x96x128xbf16, #tpu.memory_space<vmem>>, vector<1x96x128xbf16>
    %46 = vector.shape_cast %45 : vector<1x96x128xbf16> to vector<96x128xbf16>
    %cst_33 = arith.constant dense<0.000000e+00> : vector<16x128xf32>
    %47 = tpu.matmul %44, %46, %cst_33 {dimension_numbers = #tpu.dot_dimension_numbers<[1], [0], [0], [1], [0, 0, 1, 1], [], []>} : vector<16x96xbf16>, vector<96x128xbf16>, vector<16x128xf32> -> vector<16x128xf32>
    %c0_34 = arith.constant 0 : index
    %c0_35 = arith.constant 0 : index
    %c0_36 = arith.constant 0 : index
    %48 = vector.load %arg11[%c0_34, %c0_35, %c0_36] : memref<4x1x128xf32, #tpu.memory_space<vmem>>, vector<1x1x128xf32>
    %49 = vector.shape_cast %48 : vector<1x1x128xf32> to vector<1x128xf32>
    %50 = vector.broadcast %49 : vector<1x128xf32> to vector<16x128xf32>
    %51 = arith.addf %47, %50 : vector<16x128xf32>
    %52 = vector.extract_strided_slice %51 {offsets = [0, 0], sizes = [16, 32], strides = [1, 1]} : vector<16x128xf32> to vector<16x32xf32>
    %cst_37 = arith.constant 0.000000e+00 : f32
    %53 = vector.broadcast %cst_37 : f32 to vector<16x32xf32>
    %54 = arith.cmpf ogt, %52, %53 : vector<16x32xf32>
    %cst_38 = arith.constant 0.00999999977 : f32
    %55 = vector.broadcast %cst_38 : f32 to vector<16x32xf32>
    %56 = arith.mulf %55, %52 : vector<16x32xf32>
    %57 = arith.select %54, %52, %56 : vector<16x32xi1>, vector<16x32xf32>
    %58 = vector.extract_strided_slice %51 {offsets = [0, 32], sizes = [16, 32], strides = [1, 1]} : vector<16x128xf32> to vector<16x32xf32>
    %cst_39 = arith.constant 0.000000e+00 : f32
    %59 = vector.broadcast %cst_39 : f32 to vector<16x32xf32>
    %60 = arith.cmpf ogt, %58, %59 : vector<16x32xf32>
    %cst_40 = arith.constant 0.00999999977 : f32
    %61 = vector.broadcast %cst_40 : f32 to vector<16x32xf32>
    %62 = arith.mulf %61, %58 : vector<16x32xf32>
    %63 = arith.select %60, %58, %62 : vector<16x32xi1>, vector<16x32xf32>
    %64 = vector.extract_strided_slice %51 {offsets = [0, 64], sizes = [16, 1], strides = [1, 1]} : vector<16x128xf32> to vector<16x1xf32>
    %65 = tpu.transpose %64, [1, 0] : vector<16x1xf32> -> vector<1x16xf32>
    %66 = vector.broadcast %65 : vector<1x16xf32> to vector<8x16xf32>
    %67 = arith.mulf %37, %66 : vector<8x16xf32>
    %68 = arith.addf %67, %39 : vector<8x16xf32>
    %cst_41 = arith.constant dense<0xFF800000> : vector<8xf32>
    %69 = vector.multi_reduction <maximumf>, %68, %cst_41 [1] : vector<8x16xf32> to vector<8xf32>
    %70 = vector.shape_cast %69 : vector<8xf32> to vector<8x1xf32>
    %71 = vector.broadcast %70 : vector<8x1xf32> to vector<8x16xf32>
    %72 = arith.subf %68, %71 : vector<8x16xf32>
    %73 = math.exp %72 : vector<8x16xf32>
    %cst_42 = arith.constant dense<0.000000e+00> : vector<8xf32>
    %74 = vector.multi_reduction <add>, %73, %cst_42 [1] : vector<8x16xf32> to vector<8xf32>
    %75 = vector.shape_cast %74 : vector<8xf32> to vector<8x1xf32>
    %76 = vector.broadcast %75 : vector<8x1xf32> to vector<8x16xf32>
    %77 = arith.divf %73, %76 : vector<8x16xf32>
    %78 = arith.truncf %77 : vector<8x16xf32> to vector<8x16xbf16>
    %79 = arith.truncf %57 : vector<16x32xf32> to vector<16x32xbf16>
    %cst_43 = arith.constant dense<0.000000e+00> : vector<8x32xf32>
    %80 = tpu.matmul %78, %79, %cst_43 {dimension_numbers = #tpu.dot_dimension_numbers<[1], [0], [0], [1], [0, 0, 1, 1], [], []>} : vector<8x16xbf16>, vector<16x32xbf16>, vector<8x32xf32> -> vector<8x32xf32>
    %81 = tpu.concatenate %80, %12 in 1 : vector<8x32xf32>, vector<8x32xf32> -> vector<8x64xf32>
    %c0_44 = arith.constant 0 : index
    %c0_45 = arith.constant 0 : index
    %c0_46 = arith.constant 0 : index
    %82 = vector.load %arg12[%c0_44, %c0_45, %c0_46] : memref<4x64x128xbf16, #tpu.memory_space<vmem>>, vector<1x64x128xbf16>
    %83 = vector.shape_cast %82 : vector<1x64x128xbf16> to vector<64x128xbf16>
    %84 = arith.truncf %81 : vector<8x64xf32> to vector<8x64xbf16>
    %cst_47 = arith.constant dense<0.000000e+00> : vector<8x128xf32>
    %85 = tpu.matmul %84, %83, %cst_47 {dimension_numbers = #tpu.dot_dimension_numbers<[1], [0], [0], [1], [0, 0, 1, 1], [], []>} : vector<8x64xbf16>, vector<64x128xbf16>, vector<8x128xf32> -> vector<8x128xf32>
    %c0_48 = arith.constant 0 : index
    %c0_49 = arith.constant 0 : index
    %c0_50 = arith.constant 0 : index
    %86 = vector.load %arg13[%c0_48, %c0_49, %c0_50] : memref<4x1x128xf32, #tpu.memory_space<vmem>>, vector<1x1x128xf32>
    %87 = vector.shape_cast %86 : vector<1x1x128xf32> to vector<1x128xf32>
    %88 = vector.broadcast %87 : vector<1x128xf32> to vector<8x128xf32>
    %89 = arith.addf %85, %88 : vector<8x128xf32>
    %90 = vector.extract_strided_slice %89 {offsets = [0, 0], sizes = [8, 32], strides = [1, 1]} : vector<8x128xf32> to vector<8x32xf32>
    %91 = arith.negf %90 : vector<8x32xf32>
    %92 = math.exp %91 : vector<8x32xf32>
    %cst_51 = arith.constant 1.000000e+00 : f32
    %93 = vector.broadcast %cst_51 : f32 to vector<8x32xf32>
    %94 = arith.addf %93, %92 : vector<8x32xf32>
    %95 = arith.divf %93, %94 : vector<8x32xf32>
    %96 = vector.extract_strided_slice %89 {offsets = [0, 32], sizes = [8, 32], strides = [1, 1]} : vector<8x128xf32> to vector<8x32xf32>
    %97 = arith.negf %96 : vector<8x32xf32>
    %98 = math.exp %97 : vector<8x32xf32>
    %cst_52 = arith.constant 1.000000e+00 : f32
    %99 = vector.broadcast %cst_52 : f32 to vector<8x32xf32>
    %100 = arith.addf %99, %98 : vector<8x32xf32>
    %101 = arith.divf %99, %100 : vector<8x32xf32>
    %102 = vector.extract_strided_slice %89 {offsets = [0, 64], sizes = [8, 32], strides = [1, 1]} : vector<8x128xf32> to vector<8x32xf32>
    %103 = vector.extract_strided_slice %89 {offsets = [0, 96], sizes = [8, 32], strides = [1, 1]} : vector<8x128xf32> to vector<8x32xf32>
    %104 = arith.mulf %95, %103 : vector<8x32xf32>
    %105 = arith.addf %102, %104 : vector<8x32xf32>
    %106 = math.tanh %105 : vector<8x32xf32>
    %cst_53 = arith.constant 1.000000e+00 : f32
    %107 = vector.broadcast %cst_53 : f32 to vector<8x32xf32>
    %108 = arith.subf %107, %101 : vector<8x32xf32>
    %109 = arith.mulf %108, %106 : vector<8x32xf32>
    %110 = arith.mulf %101, %12 : vector<8x32xf32>
    %111 = arith.addf %109, %110 : vector<8x32xf32>
    %cst_54 = arith.constant 0.000000e+00 : f32
    %112 = vector.broadcast %cst_54 : f32 to vector<8x32xf32>
    %113 = arith.maximumf %111, %112 : vector<8x32xf32>
    %114 = arith.truncf %113 : vector<8x32xf32> to vector<8x32xbf16>
    %cst_55 = arith.constant dense<0.000000e+00> : vector<32x32xf32>
    %115 = tpu.matmul %35, %114, %cst_55 {dimension_numbers = #tpu.dot_dimension_numbers<[1], [0], [0], [1], [0, 0, 1, 1], [], []>} : vector<32x8xbf16>, vector<8x32xbf16>, vector<32x32xf32> -> vector<32x32xf32>
    %116 = vector.extract_strided_slice %115 {offsets = [0, 0], sizes = [16, 32], strides = [1, 1]} : vector<32x32xf32> to vector<16x32xf32>
    %117 = vector.extract_strided_slice %115 {offsets = [16, 0], sizes = [16, 32], strides = [1, 1]} : vector<32x32xf32> to vector<16x32xf32>
    %118 = tpu.concatenate %116, %117, %63 in 1 : vector<16x32xf32>, vector<16x32xf32>, vector<16x32xf32> -> vector<16x96xf32>
    %119 = arith.truncf %118 : vector<16x96xf32> to vector<16x96xbf16>
    %c1 = arith.constant 1 : index
    %c0_56 = arith.constant 0 : index
    %c0_57 = arith.constant 0 : index
    %120 = vector.load %arg10[%c1, %c0_56, %c0_57] : memref<4x96x128xbf16, #tpu.memory_space<vmem>>, vector<1x96x128xbf16>
    %121 = vector.shape_cast %120 : vector<1x96x128xbf16> to vector<96x128xbf16>
    %cst_58 = arith.constant dense<0.000000e+00> : vector<16x128xf32>
    %122 = tpu.matmul %119, %121, %cst_58 {dimension_numbers = #tpu.dot_dimension_numbers<[1], [0], [0], [1], [0, 0, 1, 1], [], []>} : vector<16x96xbf16>, vector<96x128xbf16>, vector<16x128xf32> -> vector<16x128xf32>
    %c1_59 = arith.constant 1 : index
    %c0_60 = arith.constant 0 : index
    %c0_61 = arith.constant 0 : index
    %123 = vector.load %arg11[%c1_59, %c0_60, %c0_61] : memref<4x1x128xf32, #tpu.memory_space<vmem>>, vector<1x1x128xf32>
    %124 = vector.shape_cast %123 : vector<1x1x128xf32> to vector<1x128xf32>
    %125 = vector.broadcast %124 : vector<1x128xf32> to vector<16x128xf32>
    %126 = arith.addf %122, %125 : vector<16x128xf32>
    %127 = vector.extract_strided_slice %126 {offsets = [0, 0], sizes = [16, 32], strides = [1, 1]} : vector<16x128xf32> to vector<16x32xf32>
    %cst_62 = arith.constant 0.000000e+00 : f32
    %128 = vector.broadcast %cst_62 : f32 to vector<16x32xf32>
    %129 = arith.cmpf ogt, %127, %128 : vector<16x32xf32>
    %cst_63 = arith.constant 0.00999999977 : f32
    %130 = vector.broadcast %cst_63 : f32 to vector<16x32xf32>
    %131 = arith.mulf %130, %127 : vector<16x32xf32>
    %132 = arith.select %129, %127, %131 : vector<16x32xi1>, vector<16x32xf32>
    %133 = vector.extract_strided_slice %126 {offsets = [0, 32], sizes = [16, 32], strides = [1, 1]} : vector<16x128xf32> to vector<16x32xf32>
    %cst_64 = arith.constant 0.000000e+00 : f32
    %134 = vector.broadcast %cst_64 : f32 to vector<16x32xf32>
    %135 = arith.cmpf ogt, %133, %134 : vector<16x32xf32>
    %cst_65 = arith.constant 0.00999999977 : f32
    %136 = vector.broadcast %cst_65 : f32 to vector<16x32xf32>
    %137 = arith.mulf %136, %133 : vector<16x32xf32>
    %138 = arith.select %135, %133, %137 : vector<16x32xi1>, vector<16x32xf32>
    %139 = vector.extract_strided_slice %126 {offsets = [0, 64], sizes = [16, 1], strides = [1, 1]} : vector<16x128xf32> to vector<16x1xf32>
    %140 = tpu.transpose %139, [1, 0] : vector<16x1xf32> -> vector<1x16xf32>
    %141 = vector.broadcast %140 : vector<1x16xf32> to vector<8x16xf32>
    %142 = arith.mulf %37, %141 : vector<8x16xf32>
    %143 = arith.addf %142, %39 : vector<8x16xf32>
    %cst_66 = arith.constant dense<0xFF800000> : vector<8xf32>
    %144 = vector.multi_reduction <maximumf>, %143, %cst_66 [1] : vector<8x16xf32> to vector<8xf32>
    %145 = vector.shape_cast %144 : vector<8xf32> to vector<8x1xf32>
    %146 = vector.broadcast %145 : vector<8x1xf32> to vector<8x16xf32>
    %147 = arith.subf %143, %146 : vector<8x16xf32>
    %148 = math.exp %147 : vector<8x16xf32>
    %cst_67 = arith.constant dense<0.000000e+00> : vector<8xf32>
    %149 = vector.multi_reduction <add>, %148, %cst_67 [1] : vector<8x16xf32> to vector<8xf32>
    %150 = vector.shape_cast %149 : vector<8xf32> to vector<8x1xf32>
    %151 = vector.broadcast %150 : vector<8x1xf32> to vector<8x16xf32>
    %152 = arith.divf %148, %151 : vector<8x16xf32>
    %153 = arith.truncf %152 : vector<8x16xf32> to vector<8x16xbf16>
    %154 = arith.truncf %132 : vector<16x32xf32> to vector<16x32xbf16>
    %cst_68 = arith.constant dense<0.000000e+00> : vector<8x32xf32>
    %155 = tpu.matmul %153, %154, %cst_68 {dimension_numbers = #tpu.dot_dimension_numbers<[1], [0], [0], [1], [0, 0, 1, 1], [], []>} : vector<8x16xbf16>, vector<16x32xbf16>, vector<8x32xf32> -> vector<8x32xf32>
    %156 = tpu.concatenate %155, %113 in 1 : vector<8x32xf32>, vector<8x32xf32> -> vector<8x64xf32>
    %c1_69 = arith.constant 1 : index
    %c0_70 = arith.constant 0 : index
    %c0_71 = arith.constant 0 : index
    %157 = vector.load %arg12[%c1_69, %c0_70, %c0_71] : memref<4x64x128xbf16, #tpu.memory_space<vmem>>, vector<1x64x128xbf16>
    %158 = vector.shape_cast %157 : vector<1x64x128xbf16> to vector<64x128xbf16>
    %159 = arith.truncf %156 : vector<8x64xf32> to vector<8x64xbf16>
    %cst_72 = arith.constant dense<0.000000e+00> : vector<8x128xf32>
    %160 = tpu.matmul %159, %158, %cst_72 {dimension_numbers = #tpu.dot_dimension_numbers<[1], [0], [0], [1], [0, 0, 1, 1], [], []>} : vector<8x64xbf16>, vector<64x128xbf16>, vector<8x128xf32> -> vector<8x128xf32>
    %c1_73 = arith.constant 1 : index
    %c0_74 = arith.constant 0 : index
    %c0_75 = arith.constant 0 : index
    %161 = vector.load %arg13[%c1_73, %c0_74, %c0_75] : memref<4x1x128xf32, #tpu.memory_space<vmem>>, vector<1x1x128xf32>
    %162 = vector.shape_cast %161 : vector<1x1x128xf32> to vector<1x128xf32>
    %163 = vector.broadcast %162 : vector<1x128xf32> to vector<8x128xf32>
    %164 = arith.addf %160, %163 : vector<8x128xf32>
    %165 = vector.extract_strided_slice %164 {offsets = [0, 0], sizes = [8, 32], strides = [1, 1]} : vector<8x128xf32> to vector<8x32xf32>
    %166 = arith.negf %165 : vector<8x32xf32>
    %167 = math.exp %166 : vector<8x32xf32>
    %cst_76 = arith.constant 1.000000e+00 : f32
    %168 = vector.broadcast %cst_76 : f32 to vector<8x32xf32>
    %169 = arith.addf %168, %167 : vector<8x32xf32>
    %170 = arith.divf %168, %169 : vector<8x32xf32>
    %171 = vector.extract_strided_slice %164 {offsets = [0, 32], sizes = [8, 32], strides = [1, 1]} : vector<8x128xf32> to vector<8x32xf32>
    %172 = arith.negf %171 : vector<8x32xf32>
    %173 = math.exp %172 : vector<8x32xf32>
    %cst_77 = arith.constant 1.000000e+00 : f32
    %174 = vector.broadcast %cst_77 : f32 to vector<8x32xf32>
    %175 = arith.addf %174, %173 : vector<8x32xf32>
    %176 = arith.divf %174, %175 : vector<8x32xf32>
    %177 = vector.extract_strided_slice %164 {offsets = [0, 64], sizes = [8, 32], strides = [1, 1]} : vector<8x128xf32> to vector<8x32xf32>
    %178 = vector.extract_strided_slice %164 {offsets = [0, 96], sizes = [8, 32], strides = [1, 1]} : vector<8x128xf32> to vector<8x32xf32>
    %179 = arith.mulf %170, %178 : vector<8x32xf32>
    %180 = arith.addf %177, %179 : vector<8x32xf32>
    %181 = math.tanh %180 : vector<8x32xf32>
    %cst_78 = arith.constant 1.000000e+00 : f32
    %182 = vector.broadcast %cst_78 : f32 to vector<8x32xf32>
    %183 = arith.subf %182, %176 : vector<8x32xf32>
    %184 = arith.mulf %183, %181 : vector<8x32xf32>
    %185 = arith.mulf %176, %113 : vector<8x32xf32>
    %186 = arith.addf %184, %185 : vector<8x32xf32>
    %cst_79 = arith.constant 0.000000e+00 : f32
    %187 = vector.broadcast %cst_79 : f32 to vector<8x32xf32>
    %188 = arith.maximumf %186, %187 : vector<8x32xf32>
    %189 = arith.truncf %188 : vector<8x32xf32> to vector<8x32xbf16>
    %cst_80 = arith.constant dense<0.000000e+00> : vector<32x32xf32>
    %190 = tpu.matmul %35, %189, %cst_80 {dimension_numbers = #tpu.dot_dimension_numbers<[1], [0], [0], [1], [0, 0, 1, 1], [], []>} : vector<32x8xbf16>, vector<8x32xbf16>, vector<32x32xf32> -> vector<32x32xf32>
    %191 = vector.extract_strided_slice %190 {offsets = [0, 0], sizes = [16, 32], strides = [1, 1]} : vector<32x32xf32> to vector<16x32xf32>
    %192 = vector.extract_strided_slice %190 {offsets = [16, 0], sizes = [16, 32], strides = [1, 1]} : vector<32x32xf32> to vector<16x32xf32>
    %193 = tpu.concatenate %191, %192, %138 in 1 : vector<16x32xf32>, vector<16x32xf32>, vector<16x32xf32> -> vector<16x96xf32>
    %194 = arith.truncf %193 : vector<16x96xf32> to vector<16x96xbf16>
    %c2 = arith.constant 2 : index
    %c0_81 = arith.constant 0 : index
    %c0_82 = arith.constant 0 : index
    %195 = vector.load %arg10[%c2, %c0_81, %c0_82] : memref<4x96x128xbf16, #tpu.memory_space<vmem>>, vector<1x96x128xbf16>
    %196 = vector.shape_cast %195 : vector<1x96x128xbf16> to vector<96x128xbf16>
    %cst_83 = arith.constant dense<0.000000e+00> : vector<16x128xf32>
    %197 = tpu.matmul %194, %196, %cst_83 {dimension_numbers = #tpu.dot_dimension_numbers<[1], [0], [0], [1], [0, 0, 1, 1], [], []>} : vector<16x96xbf16>, vector<96x128xbf16>, vector<16x128xf32> -> vector<16x128xf32>
    %c2_84 = arith.constant 2 : index
    %c0_85 = arith.constant 0 : index
    %c0_86 = arith.constant 0 : index
    %198 = vector.load %arg11[%c2_84, %c0_85, %c0_86] : memref<4x1x128xf32, #tpu.memory_space<vmem>>, vector<1x1x128xf32>
    %199 = vector.shape_cast %198 : vector<1x1x128xf32> to vector<1x128xf32>
    %200 = vector.broadcast %199 : vector<1x128xf32> to vector<16x128xf32>
    %201 = arith.addf %197, %200 : vector<16x128xf32>
    %202 = vector.extract_strided_slice %201 {offsets = [0, 0], sizes = [16, 32], strides = [1, 1]} : vector<16x128xf32> to vector<16x32xf32>
    %cst_87 = arith.constant 0.000000e+00 : f32
    %203 = vector.broadcast %cst_87 : f32 to vector<16x32xf32>
    %204 = arith.cmpf ogt, %202, %203 : vector<16x32xf32>
    %cst_88 = arith.constant 0.00999999977 : f32
    %205 = vector.broadcast %cst_88 : f32 to vector<16x32xf32>
    %206 = arith.mulf %205, %202 : vector<16x32xf32>
    %207 = arith.select %204, %202, %206 : vector<16x32xi1>, vector<16x32xf32>
    %208 = vector.extract_strided_slice %201 {offsets = [0, 32], sizes = [16, 32], strides = [1, 1]} : vector<16x128xf32> to vector<16x32xf32>
    %cst_89 = arith.constant 0.000000e+00 : f32
    %209 = vector.broadcast %cst_89 : f32 to vector<16x32xf32>
    %210 = arith.cmpf ogt, %208, %209 : vector<16x32xf32>
    %cst_90 = arith.constant 0.00999999977 : f32
    %211 = vector.broadcast %cst_90 : f32 to vector<16x32xf32>
    %212 = arith.mulf %211, %208 : vector<16x32xf32>
    %213 = arith.select %210, %208, %212 : vector<16x32xi1>, vector<16x32xf32>
    %214 = vector.extract_strided_slice %201 {offsets = [0, 64], sizes = [16, 1], strides = [1, 1]} : vector<16x128xf32> to vector<16x1xf32>
    %215 = tpu.transpose %214, [1, 0] : vector<16x1xf32> -> vector<1x16xf32>
    %216 = vector.broadcast %215 : vector<1x16xf32> to vector<8x16xf32>
    %217 = arith.mulf %37, %216 : vector<8x16xf32>
    %218 = arith.addf %217, %39 : vector<8x16xf32>
    %cst_91 = arith.constant dense<0xFF800000> : vector<8xf32>
    %219 = vector.multi_reduction <maximumf>, %218, %cst_91 [1] : vector<8x16xf32> to vector<8xf32>
    %220 = vector.shape_cast %219 : vector<8xf32> to vector<8x1xf32>
    %221 = vector.broadcast %220 : vector<8x1xf32> to vector<8x16xf32>
    %222 = arith.subf %218, %221 : vector<8x16xf32>
    %223 = math.exp %222 : vector<8x16xf32>
    %cst_92 = arith.constant dense<0.000000e+00> : vector<8xf32>
    %224 = vector.multi_reduction <add>, %223, %cst_92 [1] : vector<8x16xf32> to vector<8xf32>
    %225 = vector.shape_cast %224 : vector<8xf32> to vector<8x1xf32>
    %226 = vector.broadcast %225 : vector<8x1xf32> to vector<8x16xf32>
    %227 = arith.divf %223, %226 : vector<8x16xf32>
    %228 = arith.truncf %227 : vector<8x16xf32> to vector<8x16xbf16>
    %229 = arith.truncf %207 : vector<16x32xf32> to vector<16x32xbf16>
    %cst_93 = arith.constant dense<0.000000e+00> : vector<8x32xf32>
    %230 = tpu.matmul %228, %229, %cst_93 {dimension_numbers = #tpu.dot_dimension_numbers<[1], [0], [0], [1], [0, 0, 1, 1], [], []>} : vector<8x16xbf16>, vector<16x32xbf16>, vector<8x32xf32> -> vector<8x32xf32>
    %231 = tpu.concatenate %230, %188 in 1 : vector<8x32xf32>, vector<8x32xf32> -> vector<8x64xf32>
    %c2_94 = arith.constant 2 : index
    %c0_95 = arith.constant 0 : index
    %c0_96 = arith.constant 0 : index
    %232 = vector.load %arg12[%c2_94, %c0_95, %c0_96] : memref<4x64x128xbf16, #tpu.memory_space<vmem>>, vector<1x64x128xbf16>
    %233 = vector.shape_cast %232 : vector<1x64x128xbf16> to vector<64x128xbf16>
    %234 = arith.truncf %231 : vector<8x64xf32> to vector<8x64xbf16>
    %cst_97 = arith.constant dense<0.000000e+00> : vector<8x128xf32>
    %235 = tpu.matmul %234, %233, %cst_97 {dimension_numbers = #tpu.dot_dimension_numbers<[1], [0], [0], [1], [0, 0, 1, 1], [], []>} : vector<8x64xbf16>, vector<64x128xbf16>, vector<8x128xf32> -> vector<8x128xf32>
    %c2_98 = arith.constant 2 : index
    %c0_99 = arith.constant 0 : index
    %c0_100 = arith.constant 0 : index
    %236 = vector.load %arg13[%c2_98, %c0_99, %c0_100] : memref<4x1x128xf32, #tpu.memory_space<vmem>>, vector<1x1x128xf32>
    %237 = vector.shape_cast %236 : vector<1x1x128xf32> to vector<1x128xf32>
    %238 = vector.broadcast %237 : vector<1x128xf32> to vector<8x128xf32>
    %239 = arith.addf %235, %238 : vector<8x128xf32>
    %240 = vector.extract_strided_slice %239 {offsets = [0, 0], sizes = [8, 32], strides = [1, 1]} : vector<8x128xf32> to vector<8x32xf32>
    %241 = arith.negf %240 : vector<8x32xf32>
    %242 = math.exp %241 : vector<8x32xf32>
    %cst_101 = arith.constant 1.000000e+00 : f32
    %243 = vector.broadcast %cst_101 : f32 to vector<8x32xf32>
    %244 = arith.addf %243, %242 : vector<8x32xf32>
    %245 = arith.divf %243, %244 : vector<8x32xf32>
    %246 = vector.extract_strided_slice %239 {offsets = [0, 32], sizes = [8, 32], strides = [1, 1]} : vector<8x128xf32> to vector<8x32xf32>
    %247 = arith.negf %246 : vector<8x32xf32>
    %248 = math.exp %247 : vector<8x32xf32>
    %cst_102 = arith.constant 1.000000e+00 : f32
    %249 = vector.broadcast %cst_102 : f32 to vector<8x32xf32>
    %250 = arith.addf %249, %248 : vector<8x32xf32>
    %251 = arith.divf %249, %250 : vector<8x32xf32>
    %252 = vector.extract_strided_slice %239 {offsets = [0, 64], sizes = [8, 32], strides = [1, 1]} : vector<8x128xf32> to vector<8x32xf32>
    %253 = vector.extract_strided_slice %239 {offsets = [0, 96], sizes = [8, 32], strides = [1, 1]} : vector<8x128xf32> to vector<8x32xf32>
    %254 = arith.mulf %245, %253 : vector<8x32xf32>
    %255 = arith.addf %252, %254 : vector<8x32xf32>
    %256 = math.tanh %255 : vector<8x32xf32>
    %cst_103 = arith.constant 1.000000e+00 : f32
    %257 = vector.broadcast %cst_103 : f32 to vector<8x32xf32>
    %258 = arith.subf %257, %251 : vector<8x32xf32>
    %259 = arith.mulf %258, %256 : vector<8x32xf32>
    %260 = arith.mulf %251, %188 : vector<8x32xf32>
    %261 = arith.addf %259, %260 : vector<8x32xf32>
    %cst_104 = arith.constant 0.000000e+00 : f32
    %262 = vector.broadcast %cst_104 : f32 to vector<8x32xf32>
    %263 = arith.maximumf %261, %262 : vector<8x32xf32>
    %264 = arith.truncf %263 : vector<8x32xf32> to vector<8x32xbf16>
    %cst_105 = arith.constant dense<0.000000e+00> : vector<32x32xf32>
    %265 = tpu.matmul %35, %264, %cst_105 {dimension_numbers = #tpu.dot_dimension_numbers<[1], [0], [0], [1], [0, 0, 1, 1], [], []>} : vector<32x8xbf16>, vector<8x32xbf16>, vector<32x32xf32> -> vector<32x32xf32>
    %266 = vector.extract_strided_slice %265 {offsets = [0, 0], sizes = [16, 32], strides = [1, 1]} : vector<32x32xf32> to vector<16x32xf32>
    %267 = vector.extract_strided_slice %265 {offsets = [16, 0], sizes = [16, 32], strides = [1, 1]} : vector<32x32xf32> to vector<16x32xf32>
    %268 = tpu.concatenate %266, %267, %213 in 1 : vector<16x32xf32>, vector<16x32xf32>, vector<16x32xf32> -> vector<16x96xf32>
    %269 = arith.truncf %268 : vector<16x96xf32> to vector<16x96xbf16>
    %c3 = arith.constant 3 : index
    %c0_106 = arith.constant 0 : index
    %c0_107 = arith.constant 0 : index
    %270 = vector.load %arg10[%c3, %c0_106, %c0_107] : memref<4x96x128xbf16, #tpu.memory_space<vmem>>, vector<1x96x128xbf16>
    %271 = vector.shape_cast %270 : vector<1x96x128xbf16> to vector<96x128xbf16>
    %cst_108 = arith.constant dense<0.000000e+00> : vector<16x128xf32>
    %272 = tpu.matmul %269, %271, %cst_108 {dimension_numbers = #tpu.dot_dimension_numbers<[1], [0], [0], [1], [0, 0, 1, 1], [], []>} : vector<16x96xbf16>, vector<96x128xbf16>, vector<16x128xf32> -> vector<16x128xf32>
    %c3_109 = arith.constant 3 : index
    %c0_110 = arith.constant 0 : index
    %c0_111 = arith.constant 0 : index
    %273 = vector.load %arg11[%c3_109, %c0_110, %c0_111] : memref<4x1x128xf32, #tpu.memory_space<vmem>>, vector<1x1x128xf32>
    %274 = vector.shape_cast %273 : vector<1x1x128xf32> to vector<1x128xf32>
    %275 = vector.broadcast %274 : vector<1x128xf32> to vector<16x128xf32>
    %276 = arith.addf %272, %275 : vector<16x128xf32>
    %277 = vector.extract_strided_slice %276 {offsets = [0, 0], sizes = [16, 32], strides = [1, 1]} : vector<16x128xf32> to vector<16x32xf32>
    %cst_112 = arith.constant 0.000000e+00 : f32
    %278 = vector.broadcast %cst_112 : f32 to vector<16x32xf32>
    %279 = arith.cmpf ogt, %277, %278 : vector<16x32xf32>
    %cst_113 = arith.constant 0.00999999977 : f32
    %280 = vector.broadcast %cst_113 : f32 to vector<16x32xf32>
    %281 = arith.mulf %280, %277 : vector<16x32xf32>
    %282 = arith.select %279, %277, %281 : vector<16x32xi1>, vector<16x32xf32>
    %283 = vector.extract_strided_slice %276 {offsets = [0, 32], sizes = [16, 32], strides = [1, 1]} : vector<16x128xf32> to vector<16x32xf32>
    %cst_114 = arith.constant 0.000000e+00 : f32
    %284 = vector.broadcast %cst_114 : f32 to vector<16x32xf32>
    %285 = arith.cmpf ogt, %283, %284 : vector<16x32xf32>
    %cst_115 = arith.constant 0.00999999977 : f32
    %286 = vector.broadcast %cst_115 : f32 to vector<16x32xf32>
    %287 = arith.mulf %286, %283 : vector<16x32xf32>
    %288 = arith.select %285, %283, %287 : vector<16x32xi1>, vector<16x32xf32>
    %289 = vector.extract_strided_slice %276 {offsets = [0, 64], sizes = [16, 1], strides = [1, 1]} : vector<16x128xf32> to vector<16x1xf32>
    %290 = tpu.transpose %289, [1, 0] : vector<16x1xf32> -> vector<1x16xf32>
    %291 = vector.broadcast %290 : vector<1x16xf32> to vector<8x16xf32>
    %292 = arith.mulf %37, %291 : vector<8x16xf32>
    %293 = arith.addf %292, %39 : vector<8x16xf32>
    %cst_116 = arith.constant dense<0xFF800000> : vector<8xf32>
    %294 = vector.multi_reduction <maximumf>, %293, %cst_116 [1] : vector<8x16xf32> to vector<8xf32>
    %295 = vector.shape_cast %294 : vector<8xf32> to vector<8x1xf32>
    %296 = vector.broadcast %295 : vector<8x1xf32> to vector<8x16xf32>
    %297 = arith.subf %293, %296 : vector<8x16xf32>
    %298 = math.exp %297 : vector<8x16xf32>
    %cst_117 = arith.constant dense<0.000000e+00> : vector<8xf32>
    %299 = vector.multi_reduction <add>, %298, %cst_117 [1] : vector<8x16xf32> to vector<8xf32>
    %300 = vector.shape_cast %299 : vector<8xf32> to vector<8x1xf32>
    %301 = vector.broadcast %300 : vector<8x1xf32> to vector<8x16xf32>
    %302 = arith.divf %298, %301 : vector<8x16xf32>
    %303 = arith.truncf %302 : vector<8x16xf32> to vector<8x16xbf16>
    %304 = arith.truncf %282 : vector<16x32xf32> to vector<16x32xbf16>
    %cst_118 = arith.constant dense<0.000000e+00> : vector<8x32xf32>
    %305 = tpu.matmul %303, %304, %cst_118 {dimension_numbers = #tpu.dot_dimension_numbers<[1], [0], [0], [1], [0, 0, 1, 1], [], []>} : vector<8x16xbf16>, vector<16x32xbf16>, vector<8x32xf32> -> vector<8x32xf32>
    %306 = tpu.concatenate %305, %263 in 1 : vector<8x32xf32>, vector<8x32xf32> -> vector<8x64xf32>
    %c3_119 = arith.constant 3 : index
    %c0_120 = arith.constant 0 : index
    %c0_121 = arith.constant 0 : index
    %307 = vector.load %arg12[%c3_119, %c0_120, %c0_121] : memref<4x64x128xbf16, #tpu.memory_space<vmem>>, vector<1x64x128xbf16>
    %308 = vector.shape_cast %307 : vector<1x64x128xbf16> to vector<64x128xbf16>
    %309 = arith.truncf %306 : vector<8x64xf32> to vector<8x64xbf16>
    %cst_122 = arith.constant dense<0.000000e+00> : vector<8x128xf32>
    %310 = tpu.matmul %309, %308, %cst_122 {dimension_numbers = #tpu.dot_dimension_numbers<[1], [0], [0], [1], [0, 0, 1, 1], [], []>} : vector<8x64xbf16>, vector<64x128xbf16>, vector<8x128xf32> -> vector<8x128xf32>
    %c3_123 = arith.constant 3 : index
    %c0_124 = arith.constant 0 : index
    %c0_125 = arith.constant 0 : index
    %311 = vector.load %arg13[%c3_123, %c0_124, %c0_125] : memref<4x1x128xf32, #tpu.memory_space<vmem>>, vector<1x1x128xf32>
    %312 = vector.shape_cast %311 : vector<1x1x128xf32> to vector<1x128xf32>
    %313 = vector.broadcast %312 : vector<1x128xf32> to vector<8x128xf32>
    %314 = arith.addf %310, %313 : vector<8x128xf32>
    %315 = vector.extract_strided_slice %314 {offsets = [0, 0], sizes = [8, 32], strides = [1, 1]} : vector<8x128xf32> to vector<8x32xf32>
    %316 = arith.negf %315 : vector<8x32xf32>
    %317 = math.exp %316 : vector<8x32xf32>
    %cst_126 = arith.constant 1.000000e+00 : f32
    %318 = vector.broadcast %cst_126 : f32 to vector<8x32xf32>
    %319 = arith.addf %318, %317 : vector<8x32xf32>
    %320 = arith.divf %318, %319 : vector<8x32xf32>
    %321 = vector.extract_strided_slice %314 {offsets = [0, 32], sizes = [8, 32], strides = [1, 1]} : vector<8x128xf32> to vector<8x32xf32>
    %322 = arith.negf %321 : vector<8x32xf32>
    %323 = math.exp %322 : vector<8x32xf32>
    %cst_127 = arith.constant 1.000000e+00 : f32
    %324 = vector.broadcast %cst_127 : f32 to vector<8x32xf32>
    %325 = arith.addf %324, %323 : vector<8x32xf32>
    %326 = arith.divf %324, %325 : vector<8x32xf32>
    %327 = vector.extract_strided_slice %314 {offsets = [0, 64], sizes = [8, 32], strides = [1, 1]} : vector<8x128xf32> to vector<8x32xf32>
    %328 = vector.extract_strided_slice %314 {offsets = [0, 96], sizes = [8, 32], strides = [1, 1]} : vector<8x128xf32> to vector<8x32xf32>
    %329 = arith.mulf %320, %328 : vector<8x32xf32>
    %330 = arith.addf %327, %329 : vector<8x32xf32>
    %331 = math.tanh %330 : vector<8x32xf32>
    %cst_128 = arith.constant 1.000000e+00 : f32
    %332 = vector.broadcast %cst_128 : f32 to vector<8x32xf32>
    %333 = arith.subf %332, %326 : vector<8x32xf32>
    %334 = arith.mulf %333, %331 : vector<8x32xf32>
    %335 = arith.mulf %326, %263 : vector<8x32xf32>
    %336 = arith.addf %334, %335 : vector<8x32xf32>
    %c0_129 = arith.constant 0 : index
    %c0_130 = arith.constant 0 : index
    %c0_131 = arith.constant 0 : index
    %337 = vector.load %arg14[%c0_129, %c0_130, %c0_131] : memref<1x8x32xf32, #tpu.memory_space<vmem>>, vector<1x8x32xf32>
    %338 = vector.shape_cast %337 : vector<1x8x32xf32> to vector<8x32xf32>
    %339 = vector.shape_cast %336 : vector<8x32xf32> to vector<1x8x32xf32>
    tpu.vector_store %arg14[%c0_129, %c0_130, %c0_131], %339 {strides = array<i32>} : memref<1x8x32xf32, #tpu.memory_space<vmem>>, vector<1x8x32xf32>,
    %c0_132 = arith.constant 0 : index
    %c0_133 = arith.constant 0 : index
    %c0_134 = arith.constant 0 : index
    %340 = vector.load %arg15[%c0_132, %c0_133, %c0_134] : memref<1x16x32xf32, #tpu.memory_space<vmem>>, vector<1x16x32xf32>
    %341 = vector.shape_cast %340 : vector<1x16x32xf32> to vector<16x32xf32>
    %342 = vector.shape_cast %288 : vector<16x32xf32> to vector<1x16x32xf32>
    tpu.vector_store %arg15[%c0_132, %c0_133, %c0_134], %342 {strides = array<i32>} : memref<1x16x32xf32, #tpu.memory_space<vmem>>, vector<1x16x32xf32>,
    return
  }
  func.func @transform_0(%arg0: i32) -> (i32, i32, i32) {
    %c0_i32 = arith.constant 0 : i32
    %c0_i32_0 = arith.constant 0 : i32
    %c0_i32_1 = arith.constant 0 : i32
    return %arg0, %c0_i32, %c0_i32_0 : i32, i32, i32
  }
  func.func @transform_1(%arg0: i32) -> (i32, i32, i32) {
    %c0_i32 = arith.constant 0 : i32
    %c0_i32_0 = arith.constant 0 : i32
    %c0_i32_1 = arith.constant 0 : i32
    return %arg0, %c0_i32, %c0_i32_0 : i32, i32, i32
  }
  func.func @transform_2(%arg0: i32) -> (i32, i32, i32) {
    %c0_i32 = arith.constant 0 : i32
    %c0_i32_0 = arith.constant 0 : i32
    %c0_i32_1 = arith.constant 0 : i32
    return %arg0, %c0_i32, %c0_i32_0 : i32, i32, i32
  }
  func.func @transform_3(%arg0: i32) -> (i32, i32, i32) {
    %c0_i32 = arith.constant 0 : i32
    %c0_i32_0 = arith.constant 0 : i32
    %c0_i32_1 = arith.constant 0 : i32
    return %arg0, %c0_i32, %c0_i32_0 : i32, i32, i32
  }
  func.func @transform_4(%arg0: i32) -> (i32, i32, i32) {
    %c0_i32 = arith.constant 0 : i32
    %c0_i32_0 = arith.constant 0 : i32
    %c0_i32_1 = arith.constant 0 : i32
    return %arg0, %c0_i32, %c0_i32_0 : i32, i32, i32
  }
  func.func @transform_5(%arg0: i32) -> (i32, i32) {
    %c0_i32 = arith.constant 0 : i32
    %c0_i32_0 = arith.constant 0 : i32
    %c0_i32_1 = arith.constant 0 : i32
    return %c0_i32, %c0_i32_0 : i32, i32
  }
  func.func @transform_6(%arg0: i32) -> (i32, i32) {
    %c0_i32 = arith.constant 0 : i32
    %c0_i32_0 = arith.constant 0 : i32
    %c0_i32_1 = arith.constant 0 : i32
    return %c0_i32, %c0_i32_0 : i32, i32
  }
  func.func @transform_7(%arg0: i32) -> (i32, i32) {
    %c0_i32 = arith.constant 0 : i32
    %c0_i32_0 = arith.constant 0 : i32
    %c0_i32_1 = arith.constant 0 : i32
    return %c0_i32, %c0_i32_0 : i32, i32
  }
  func.func @transform_8(%arg0: i32) -> (i32, i32) {
    %c0_i32 = arith.constant 0 : i32
    %c0_i32_0 = arith.constant 0 : i32
    %c0_i32_1 = arith.constant 0 : i32
    return %c0_i32, %c0_i32_0 : i32, i32
  }
  func.func @transform_9(%arg0: i32) -> (i32, i32, i32) {
    %c0_i32 = arith.constant 0 : i32
    %c0_i32_0 = arith.constant 0 : i32
    %c0_i32_1 = arith.constant 0 : i32
    %c0_i32_2 = arith.constant 0 : i32
    return %c0_i32, %c0_i32_0, %c0_i32_1 : i32, i32, i32
  }
  func.func @transform_10(%arg0: i32) -> (i32, i32, i32) {
    %c0_i32 = arith.constant 0 : i32
    %c0_i32_0 = arith.constant 0 : i32
    %c0_i32_1 = arith.constant 0 : i32
    %c0_i32_2 = arith.constant 0 : i32
    return %c0_i32, %c0_i32_0, %c0_i32_1 : i32, i32, i32
  }
  func.func @transform_11(%arg0: i32) -> (i32, i32, i32) {
    %c0_i32 = arith.constant 0 : i32
    %c0_i32_0 = arith.constant 0 : i32
    %c0_i32_1 = arith.constant 0 : i32
    %c0_i32_2 = arith.constant 0 : i32
    return %c0_i32, %c0_i32_0, %c0_i32_1 : i32, i32, i32
  }
  func.func @transform_12(%arg0: i32) -> (i32, i32, i32) {
    %c0_i32 = arith.constant 0 : i32
    %c0_i32_0 = arith.constant 0 : i32
    %c0_i32_1 = arith.constant 0 : i32
    %c0_i32_2 = arith.constant 0 : i32
    return %c0_i32, %c0_i32_0, %c0_i32_1 : i32, i32, i32
  }
  func.func @transform_13(%arg0: i32) -> (i32, i32, i32) {
    %c0_i32 = arith.constant 0 : i32
    %c0_i32_0 = arith.constant 0 : i32
    %c0_i32_1 = arith.constant 0 : i32
    return %arg0, %c0_i32, %c0_i32_0 : i32, i32, i32
  }
  func.func @transform_14(%arg0: i32) -> (i32, i32, i32) {
    %c0_i32 = arith.constant 0 : i32
    %c0_i32_0 = arith.constant 0 : i32
    %c0_i32_1 = arith.constant 0 : i32
    return %arg0, %c0_i32, %c0_i32_0 : i32, i32, i32
  }
}

</mosaic_0001>

<llo_original>
// kernel: tpu_custom_call.1
$region0: #{tpu_custom_call.1}
  #allocation0 [shape = 'u32[]', space=smem, size = 0x4, offset = 0x4, fixed_abs, tag = 'smem constant byte address 0x4 - core index']
  #allocation1 [shape = 'u32[72,128]{1,0:T(1,128)}', space=vmem, size = 0x9000, scoped, tag = 'internal scratch']
  %s0 = inlined_call_operand.vmem [shape: f32[8,8,16], index: 0, kind: input, shape index: {}]
  %s1 = inlined_call_operand.vmem [shape: f32[8,16,8], index: 1, kind: input, shape index: {}]
  %s2 = inlined_call_operand.vmem [shape: s32[8,32,1], index: 2, kind: input, shape index: {}]
  %s3 = inlined_call_operand.vmem [shape: f32[8,8,16], index: 3, kind: input, shape index: {}]
  %s4 = inlined_call_operand.hbm [shape: f32[8,8,16], index: 4, kind: input, shape index: {}]
  %s5 = inlined_call_operand.vmem [shape: bf16[16,32], index: 5, kind: input, shape index: {}]
  %s6 = inlined_call_operand.hbm [shape: f32[1,32], index: 6, kind: input, shape index: {}]
  %s7 = inlined_call_operand.vmem [shape: bf16[8,32], index: 7, kind: input, shape index: {}]
  %s8 = inlined_call_operand.hbm [shape: f32[1,32], index: 8, kind: input, shape index: {}]
  %s9 = inlined_call_operand.vmem [shape: bf16[4,96,128], index: 9, kind: input, shape index: {}]
  %s10 = inlined_call_operand.vmem [shape: f32[4,1,128], index: 10, kind: input, shape index: {}]
  %s11 = inlined_call_operand.vmem [shape: bf16[4,64,128], index: 11, kind: input, shape index: {}]
  %s12 = inlined_call_operand.hbm [shape: f32[4,1,128], index: 12, kind: input, shape index: {}]
  %s13 = inlined_call_operand.hbm [shape: f32[8,8,32], index: 13, kind: output, shape index: {0}]
  %s14 = inlined_call_operand.hbm [shape: f32[8,16,32], index: 14, kind: output, shape index: {1}]
  %15 = xla_tuple %s13, %s14
  %s16 = sld [smem:[#allocation0]]
  $region109: #{tpu_custom_call.1} parent=0
    _
  %s18 = ssub.s32 1, %s16
  %s19 = scalar_select 0, %s18, %s16
  $region1: #{tpu_custom_call.1} parent=0
    #allocation2 [shape = 'u8[8192]{0}', space=vmem, size = 0x2000, scoped, tag = 'input window, operand 4']
    #allocation3 [shape = 's32[2]{0}', space=sflag, size = 0x8, scoped, tag = 'scoped memory for tpu_custom_call.1']
    #allocation4 [shape = 's32[2]{0}', space=sflag, size = 0x8, scoped, tag = 'scoped memory for tpu_custom_call.1']
    #allocation5 [shape = 'u8[512]{0}', space=vmem, size = 0x400, scoped, tag = 'input window, operand 6, single buffered']
    #allocation6 [shape = 's32[1]{0}', space=sflag, size = 0x4, scoped, tag = 'scoped memory for tpu_custom_call.1']
    #allocation7 [shape = 'u8[512]{0}', space=vmem, size = 0x400, scoped, tag = 'input window, operand 8, single buffered']
    #allocation8 [shape = 'u8[2048]{0}', space=vmem, size = 0x800, scoped, tag = 'input window, operand 12, single buffered']
    #allocation9 [shape = 's32[1]{0}', space=sflag, size = 0x4, scoped, tag = 'scoped memory for tpu_custom_call.1']
    #allocation10 [shape = 'u8[8192]{0}', space=vmem, size = 0x2000, scoped, tag = 'output window, operand 0']
    #allocation11 [shape = 'u8[16384]{0}', space=vmem, size = 0x4000, scoped, tag = 'output window, operand 1']
    #allocation12 [shape = 's32[2]{0}', space=sflag, size = 0x8, scoped, tag = 'scoped memory for tpu_custom_call.1']
    %20 = vsyncpa [#allocation3], 0
    %s21 = scalar_lea.sflag [#allocation3], 1
    %22 = vsyncpa %s21, 0
    %23 = vsyncpa [#allocation6], 0
    %24 = vsyncpa [#allocation9], 0
    %25 = vsyncpa [#allocation4], 0
    %s26 = scalar_lea.sflag [#allocation4], 1
    %27 = vsyncpa %s26, 0
    %28 = vsyncpa [#allocation12], 0
    %s29 = scalar_lea.sflag [#allocation12], 1
    %30 = vsyncpa %s29, 0
    loop: start=0, step=1, limit=10
    $region2: #{tpu_custom_call.1} parent=1 // loop_pre_header
      _
    $region3: #{tpu_custom_call.1} parent=1 // loop_header
      %s32 = sphi 0, %s36
      %p33 = scmp.ge.s32.totalorder %s32, 10
      %s42 = sphi 0, %s44
      %s45 = sphi 0, %s42
      %s46 = sphi 0, %s45
      %s62 = sphi 0, %s46
      %s68 = sphi 0, %s70
      %s71 = sphi 0, %s68
      %s72 = sphi 0, %s71
      %s88 = sphi 0, %s72
      %s94 = sphi 0, %s96
      %s97 = sphi 0, %s94
      %s98 = sphi 0, %s97
      %s114 = sphi 0, %s98
      %s120 = sphi 0, %s122
      %s123 = sphi 0, %s120
      %s124 = sphi 0, %s123
      %s140 = sphi 0, %s124
      %s146 = sphi 0, %s148
      %s149 = sphi 0, %s146
      %s150 = sphi 0, %s149
      %s166 = sphi 0, %s150
      %s170 = sphi 0, %s170
      %s172 = sphi 0, %s170
      %s173 = sphi 0, %s172
      %s187 = sphi 0, %s173
      %s191 = sphi 0, %s191
      %s193 = sphi 0, %s191
      %s194 = sphi 0, %s193
      %s208 = sphi 0, %s194
      %s212 = sphi 0, %s212
      %s214 = sphi 0, %s212
      %s215 = sphi 0, %s214
      %s229 = sphi 0, %s215
      %s233 = sphi 0, %s233
      %s235 = sphi 0, %s233
      %s236 = sphi 0, %s235
      %s250 = sphi 0, %s236
      %s254 = sphi 0, %s254
      %s256 = sphi 0, %s254
      %s257 = sphi 0, %s256
      %s271 = sphi 0, %s257
      %s275 = sphi 0, %s275
      %s277 = sphi 0, %s275
      %s278 = sphi 0, %s277
      %s292 = sphi 0, %s278
      %s296 = sphi 0, %s296
      %s298 = sphi 0, %s296
      %s299 = sphi 0, %s298
      %s313 = sphi 0, %s299
      %s317 = sphi 0, %s317
      %s319 = sphi 0, %s317
      %s320 = sphi 0, %s319
      %s334 = sphi 0, %s320
      %s340 = sphi 0, %s342
      %s343 = sphi 0, %s340
      %s344 = sphi 0, %s343
      %s360 = sphi 0, %s344
      %s366 = sphi 0, %s368
      %s369 = sphi 0, %s366
      %s370 = sphi 0, %s369
      %s386 = sphi 0, %s370
    $region4: #{tpu_custom_call.1} parent=1 // loop_header_branch
      %35 = sbr.rel (%p33) target = $region8
    $region5: #{tpu_custom_call.1} parent=1 // loop_body
      %s37 = ssub.s32 %s32, 1
      %s38 = ssub.s32 %s32, 2
      %s39 = sadd.s32 %s32, 1
      %s40 = ssub.s32 %s32, %s39
      %p41 = scmp.eq.s32.totalorder %s40, 0
      %s43 = sadd.s32 %s42, 1
      %s44 = scalar_select %p41, %s42, %s43
      %p47 = pneg %p41
      %p48 = scmp.eq.s32.totalorder %s32, 7
      %p49 = por %p47, %p48
      %p50 = scmp.ne.s32.totalorder %s42, %s45
      %p51 = scmp.eq.s32.totalorder %s32, 0
      %p52 = por %p50, %p51
      %p53 = scmp.ne.s32.totalorder %s42, %s45
      %p54 = scmp.eq.s32.totalorder %s37, 7
      %p55 = por %p53, %p54
      %p56 = scmp.ne.s32.totalorder %s45, %s46
      %p57 = scmp.eq.s32.totalorder %s37, 0
      %p58 = por %p56, %p57
      %p59 = scmp.ne.s32.totalorder %s45, %s46
      %p60 = scmp.eq.s32.totalorder %s38, 7
      %p61 = por %p59, %p60
      %p63 = scmp.ne.s32.totalorder %s46, %s62
      %p64 = scmp.eq.s32.totalorder %s38, 0
      %p65 = por %p63, %p64
      %s66 = ssub.s32 %s32, %s39
      %p67 = scmp.eq.s32.totalorder %s66, 0
      %s69 = sadd.s32 %s68, 1
      %s70 = scalar_select %p67, %s68, %s69
      %p73 = pneg %p67
      %p74 = scmp.eq.s32.totalorder %s32, 7
      %p75 = por %p73, %p74
      %p76 = scmp.ne.s32.totalorder %s68, %s71
      %p77 = scmp.eq.s32.totalorder %s32, 0
      %p78 = por %p76, %p77
      %p79 = scmp.ne.s32.totalorder %s68, %s71
      %p80 = scmp.eq.s32.totalorder %s37, 7
      %p81 = por %p79, %p80
      %p82 = scmp.ne.s32.totalorder %s71, %s72
      %p83 = scmp.eq.s32.totalorder %s37, 0
      %p84 = por %p82, %p83
      %p85 = scmp.ne.s32.totalorder %s71, %s72
      %p86 = scmp.eq.s32.totalorder %s38, 7
      %p87 = por %p85, %p86
      %p89 = scmp.ne.s32.totalorder %s72, %s88
      %p90 = scmp.eq.s32.totalorder %s38, 0
      %p91 = por %p89, %p90
      %s92 = ssub.s32 %s32, %s39
      %p93 = scmp.eq.s32.totalorder %s92, 0
      %s95 = sadd.s32 %s94, 1
      %s96 = scalar_select %p93, %s94, %s95
      %p99 = pneg %p93
      %p100 = scmp.eq.s32.totalorder %s32, 7
      %p101 = por %p99, %p100
      %p102 = scmp.ne.s32.totalorder %s94, %s97
      %p103 = scmp.eq.s32.totalorder %s32, 0
      %p104 = por %p102, %p103
      %p105 = scmp.ne.s32.totalorder %s94, %s97
      %p106 = scmp.eq.s32.totalorder %s37, 7
      %p107 = por %p105, %p106
      %p108 = scmp.ne.s32.totalorder %s97, %s98
      %p109 = scmp.eq.s32.totalorder %s37, 0
      %p110 = por %p108, %p109
      %p111 = scmp.ne.s32.totalorder %s97, %s98
      %p112 = scmp.eq.s32.totalorder %s38, 7
      %p113 = por %p111, %p112
      %p115 = scmp.ne.s32.totalorder %s98, %s114
      %p116 = scmp.eq.s32.totalorder %s38, 0
      %p117 = por %p115, %p116
      %s118 = ssub.s32 %s32, %s39
      %p119 = scmp.eq.s32.totalorder %s118, 0
      %s121 = sadd.s32 %s120, 1
      %s122 = scalar_select %p119, %s120, %s121
      %p125 = pneg %p119
      %p126 = scmp.eq.s32.totalorder %s32, 7
      %p127 = por %p125, %p126
      %p128 = scmp.ne.s32.totalorder %s120, %s123
      %p129 = scmp.eq.s32.totalorder %s32, 0
      %p130 = por %p128, %p129
      %p131 = scmp.ne.s32.totalorder %s120, %s123
      %p132 = scmp.eq.s32.totalorder %s37, 7
      %p133 = por %p131, %p132
      %p134 = scmp.ne.s32.totalorder %s123, %s124
      %p135 = scmp.eq.s32.totalorder %s37, 0
      %p136 = por %p134, %p135
      %p137 = scmp.ne.s32.totalorder %s123, %s124
      %p138 = scmp.eq.s32.totalorder %s38, 7
      %p139 = por %p137, %p138
      %p141 = scmp.ne.s32.totalorder %s124, %s140
      %p142 = scmp.eq.s32.totalorder %s38, 0
      %p143 = por %p141, %p142
      %s144 = ssub.s32 %s32, %s39
      %p145 = scmp.eq.s32.totalorder %s144, 0
      %s147 = sadd.s32 %s146, 1
      %s148 = scalar_select %p145, %s146, %s147
      %p151 = pneg %p145
      %p152 = scmp.eq.s32.totalorder %s32, 7
      %p153 = por %p151, %p152
      %p154 = scmp.ne.s32.totalorder %s146, %s149
      %p155 = scmp.eq.s32.totalorder %s32, 0
      %p156 = por %p154, %p155
      %p157 = scmp.ne.s32.totalorder %s146, %s149
      %p158 = scmp.eq.s32.totalorder %s37, 7
      %p159 = por %p157, %p158
      %p160 = scmp.ne.s32.totalorder %s149, %s150
      %p161 = scmp.eq.s32.totalorder %s37, 0
      %p162 = por %p160, %p161
      %p163 = scmp.ne.s32.totalorder %s149, %s150
      %p164 = scmp.eq.s32.totalorder %s38, 7
      %p165 = por %p163, %p164
      %p167 = scmp.ne.s32.totalorder %s150, %s166
      %p168 = scmp.eq.s32.totalorder %s38, 0
      %p169 = por %p167, %p168
      %s171 = sadd.s32 %s170, 1
      %p174 = scmp.eq.s32.totalorder %s32, 7
      %p175 = scmp.ne.s32.totalorder %s170, %s172
      %p176 = scmp.eq.s32.totalorder %s32, 0
      %p177 = por %p175, %p176
      %p178 = scmp.ne.s32.totalorder %s170, %s172
      %p179 = scmp.eq.s32.totalorder %s37, 7
      %p180 = por %p178, %p179
      %p181 = scmp.ne.s32.totalorder %s172, %s173
      %p182 = scmp.eq.s32.totalorder %s37, 0
      %p183 = por %p181, %p182
      %p184 = scmp.ne.s32.totalorder %s172, %s173
      %p185 = scmp.eq.s32.totalorder %s38, 7
      %p186 = por %p184, %p185
      %p188 = scmp.ne.s32.totalorder %s173, %s187
      %p189 = scmp.eq.s32.totalorder %s38, 0
      %p190 = por %p188, %p189
      %s192 = sadd.s32 %s191, 1
      %p195 = scmp.eq.s32.totalorder %s32, 7
      %p196 = scmp.ne.s32.totalorder %s191, %s193
      %p197 = scmp.eq.s32.totalorder %s32, 0
      %p198 = por %p196, %p197
      %p199 = scmp.ne.s32.totalorder %s191, %s193
      %p200 = scmp.eq.s32.totalorder %s37, 7
      %p201 = por %p199, %p200
      %p202 = scmp.ne.s32.totalorder %s193, %s194
      %p203 = scmp.eq.s32.totalorder %s37, 0
      %p204 = por %p202, %p203
      %p205 = scmp.ne.s32.totalorder %s193, %s194
      %p206 = scmp.eq.s32.totalorder %s38, 7
      %p207 = por %p205, %p206
      %p209 = scmp.ne.s32.totalorder %s194, %s208
      %p210 = scmp.eq.s32.totalorder %s38, 0
      %p211 = por %p209, %p210
      %s213 = sadd.s32 %s212, 1
      %p216 = scmp.eq.s32.totalorder %s32, 7
      %p217 = scmp.ne.s32.totalorder %s212, %s214
      %p218 = scmp.eq.s32.totalorder %s32, 0
      %p219 = por %p217, %p218
      %p220 = scmp.ne.s32.totalorder %s212, %s214
      %p221 = scmp.eq.s32.totalorder %s37, 7
      %p222 = por %p220, %p221
      %p223 = scmp.ne.s32.totalorder %s214, %s215
      %p224 = scmp.eq.s32.totalorder %s37, 0
      %p225 = por %p223, %p224
      %p226 = scmp.ne.s32.totalorder %s214, %s215
      %p227 = scmp.eq.s32.totalorder %s38, 7
      %p228 = por %p226, %p227
      %p230 = scmp.ne.s32.totalorder %s215, %s229
      %p231 = scmp.eq.s32.totalorder %s38, 0
      %p232 = por %p230, %p231
      %s234 = sadd.s32 %s233, 1
      %p237 = scmp.eq.s32.totalorder %s32, 7
      %p238 = scmp.ne.s32.totalorder %s233, %s235
      %p239 = scmp.eq.s32.totalorder %s32, 0
      %p240 = por %p238, %p239
      %p241 = scmp.ne.s32.totalorder %s233, %s235
      %p242 = scmp.eq.s32.totalorder %s37, 7
      %p243 = por %p241, %p242
      %p244 = scmp.ne.s32.totalorder %s235, %s236
      %p245 = scmp.eq.s32.totalorder %s37, 0
      %p246 = por %p244, %p245
      %p247 = scmp.ne.s32.totalorder %s235, %s236
      %p248 = scmp.eq.s32.totalorder %s38, 7
      %p249 = por %p247, %p248
      %p251 = scmp.ne.s32.totalorder %s236, %s250
      %p252 = scmp.eq.s32.totalorder %s38, 0
      %p253 = por %p251, %p252
      %s255 = sadd.s32 %s254, 1
      %p258 = scmp.eq.s32.totalorder %s32, 7
      %p259 = scmp.ne.s32.totalorder %s254, %s256
      %p260 = scmp.eq.s32.totalorder %s32, 0
      %p261 = por %p259, %p260
      %p262 = scmp.ne.s32.totalorder %s254, %s256
      %p263 = scmp.eq.s32.totalorder %s37, 7
      %p264 = por %p262, %p263
      %p265 = scmp.ne.s32.totalorder %s256, %s257
      %p266 = scmp.eq.s32.totalorder %s37, 0
      %p267 = por %p265, %p266
      %p268 = scmp.ne.s32.totalorder %s256, %s257
      %p269 = scmp.eq.s32.totalorder %s38, 7
      %p270 = por %p268, %p269
      %p272 = scmp.ne.s32.totalorder %s257, %s271
      %p273 = scmp.eq.s32.totalorder %s38, 0
      %p274 = por %p272, %p273
      %s276 = sadd.s32 %s275, 1
      %p279 = scmp.eq.s32.totalorder %s32, 7
      %p280 = scmp.ne.s32.totalorder %s275, %s277
      %p281 = scmp.eq.s32.totalorder %s32, 0
      %p282 = por %p280, %p281
      %p283 = scmp.ne.s32.totalorder %s275, %s277
      %p284 = scmp.eq.s32.totalorder %s37, 7
      %p285 = por %p283, %p284
      %p286 = scmp.ne.s32.totalorder %s277, %s278
      %p287 = scmp.eq.s32.totalorder %s37, 0
      %p288 = por %p286, %p287
      %p289 = scmp.ne.s32.totalorder %s277, %s278
      %p290 = scmp.eq.s32.totalorder %s38, 7
      %p291 = por %p289, %p290
      %p293 = scmp.ne.s32.totalorder %s278, %s292
      %p294 = scmp.eq.s32.totalorder %s38, 0
      %p295 = por %p293, %p294
      %s297 = sadd.s32 %s296, 1
      %p300 = scmp.eq.s32.totalorder %s32, 7
      %p301 = scmp.ne.s32.totalorder %s296, %s298
      %p302 = scmp.eq.s32.totalorder %s32, 0
      %p303 = por %p301, %p302
      %p304 = scmp.ne.s32.totalorder %s296, %s298
      %p305 = scmp.eq.s32.totalorder %s37, 7
      %p306 = por %p304, %p305
      %p307 = scmp.ne.s32.totalorder %s298, %s299
      %p308 = scmp.eq.s32.totalorder %s37, 0
      %p309 = por %p307, %p308
      %p310 = scmp.ne.s32.totalorder %s298, %s299
      %p311 = scmp.eq.s32.totalorder %s38, 7
      %p312 = por %p310, %p311
      %p314 = scmp.ne.s32.totalorder %s299, %s313
      %p315 = scmp.eq.s32.totalorder %s38, 0
      %p316 = por %p314, %p315
      %s318 = sadd.s32 %s317, 1
      %p321 = scmp.eq.s32.totalorder %s32, 7
      %p322 = scmp.ne.s32.totalorder %s317, %s319
      %p323 = scmp.eq.s32.totalorder %s32, 0
      %p324 = por %p322, %p323
      %p325 = scmp.ne.s32.totalorder %s317, %s319
      %p326 = scmp.eq.s32.totalorder %s37, 7
      %p327 = por %p325, %p326
      %p328 = scmp.ne.s32.totalorder %s319, %s320
      %p329 = scmp.eq.s32.totalorder %s37, 0
      %p330 = por %p328, %p329
      %p331 = scmp.ne.s32.totalorder %s319, %s320
      %p332 = scmp.eq.s32.totalorder %s38, 7
      %p333 = por %p331, %p332
      %p335 = scmp.ne.s32.totalorder %s320, %s334
      %p336 = scmp.eq.s32.totalorder %s38, 0
      %p337 = por %p335, %p336
      %s338 = ssub.s32 %s32, %s39
      %p339 = scmp.eq.s32.totalorder %s338, 0
      %s341 = sadd.s32 %s340, 1
      %s342 = scalar_select %p339, %s340, %s341
      %p345 = pneg %p339
      %p346 = scmp.eq.s32.totalorder %s32, 7
      %p347 = por %p345, %p346
      %p348 = scmp.ne.s32.totalorder %s340, %s343
      %p349 = scmp.eq.s32.totalorder %s32, 0
      %p350 = por %p348, %p349
      %p351 = scmp.ne.s32.totalorder %s340, %s343
      %p352 = scmp.eq.s32.totalorder %s37, 7
      %p353 = por %p351, %p352
      %p354 = scmp.ne.s32.totalorder %s343, %s344
      %p355 = scmp.eq.s32.totalorder %s37, 0
      %p356 = por %p354, %p355
      %p357 = scmp.ne.s32.totalorder %s343, %s344
      %p358 = scmp.eq.s32.totalorder %s38, 7
      %p359 = por %p357, %p358
      %p361 = scmp.ne.s32.totalorder %s344, %s360
      %p362 = scmp.eq.s32.totalorder %s38, 0
      %p363 = por %p361, %p362
      %s364 = ssub.s32 %s32, %s39
      %p365 = scmp.eq.s32.totalorder %s364, 0
      %s367 = sadd.s32 %s366, 1
      %s368 = scalar_select %p365, %s366, %s367
      %p371 = pneg %p365
      %p372 = scmp.eq.s32.totalorder %s32, 7
      %p373 = por %p371, %p372
      %p374 = scmp.ne.s32.totalorder %s366, %s369
      %p375 = scmp.eq.s32.totalorder %s32, 0
      %p376 = por %p374, %p375
      %p377 = scmp.ne.s32.totalorder %s366, %s369
      %p378 = scmp.eq.s32.totalorder %s37, 7
      %p379 = por %p377, %p378
      %p380 = scmp.ne.s32.totalorder %s369, %s370
      %p381 = scmp.eq.s32.totalorder %s37, 0
      %p382 = por %p380, %p381
      %p383 = scmp.ne.s32.totalorder %s369, %s370
      %p384 = scmp.eq.s32.totalorder %s38, 7
      %p385 = por %p383, %p384
      %p387 = scmp.ne.s32.totalorder %s370, %s386
      %p388 = scmp.eq.s32.totalorder %s38, 0
      %p389 = por %p387, %p388
      %p390 = scmp.le.s32.totalorder 1, %s32
      %p391 = scmp.lt.s32.totalorder %s32, 9
      %p392 = pnand %p390, %p391
      %p393 = pneg %p392
      // Predicated region
      $region9: #{tpu_custom_call.1} parent=5 // pred_check
        _
      $region10: #{tpu_custom_call.1} parent=5 // pred_check_branch
        %395 = sbr.rel (%p392) target = $region12
      $region11: #{tpu_custom_call.1} parent=5 // pred_region
        %s396 = ssub.s32 %s32, 1
        // Predicated region
        $region13: #{tpu_custom_call.1} parent=11 // pred_check
          %p397 = pneg %p183
        $region14: #{tpu_custom_call.1} parent=11 // pred_check_branch
          %399 = sbr.rel (%p397) target = $region16
        $region15: #{tpu_custom_call.1} parent=11 // pred_region
          _
        $region16: #{tpu_custom_call.1} parent=11 // pred_fallthru
          _
        // Predicated region
        $region17: #{tpu_custom_call.1} parent=11 // pred_check
          %p400 = pneg %p204
        $region18: #{tpu_custom_call.1} parent=11 // pred_check_branch
          %402 = sbr.rel (%p400) target = $region20
        $region19: #{tpu_custom_call.1} parent=11 // pred_region
          %404 = vsyncadd [#allocation6], 0
          %s406 = sshll.u32 %s6, 4
          %s407 = int_to_ptr.hbm [resolvable:$true] %s406
          %s408 = sshll.u32 [#allocation5], 4
          %s409 = int_to_ptr.vmem [resolvable:$true] %s408
          %411 = dma.hbm_to_vmem [thread:$0]  %s407, 16, %s409, [#allocation6]
        $region20: #{tpu_custom_call.1} parent=11 // pred_fallthru
          _
        // Predicated region
        $region21: #{tpu_custom_call.1} parent=11 // pred_check
          %p412 = pneg %p225
        $region22: #{tpu_custom_call.1} parent=11 // pred_check_branch
          %414 = sbr.rel (%p412) target = $region24
        $region23: #{tpu_custom_call.1} parent=11 // pred_region
          _
        $region24: #{tpu_custom_call.1} parent=11 // pred_fallthru
          _
        // Predicated region
        $region25: #{tpu_custom_call.1} parent=11 // pred_check
          %p415 = pneg %p246
        $region26: #{tpu_custom_call.1} parent=11 // pred_check_branch
          %417 = sbr.rel (%p415) target = $region28
        $region27: #{tpu_custom_call.1} parent=11 // pred_region
          %419 = vsyncadd [#allocation6], 0
          %s421 = sshll.u32 %s8, 4
          %s422 = int_to_ptr.hbm [resolvable:$true] %s421
          %s423 = sshll.u32 [#allocation7], 4
          %s424 = int_to_ptr.vmem [resolvable:$true] %s423
          %426 = dma.hbm_to_vmem [thread:$0]  %s422, 16, %s424, [#allocation6]
        $region28: #{tpu_custom_call.1} parent=11 // pred_fallthru
          _
        // Predicated region
        $region29: #{tpu_custom_call.1} parent=11 // pred_check
          %p427 = pneg %p267
        $region30: #{tpu_custom_call.1} parent=11 // pred_check_branch
          %429 = sbr.rel (%p427) target = $region32
        $region31: #{tpu_custom_call.1} parent=11 // pred_region
          _
        $region32: #{tpu_custom_call.1} parent=11 // pred_fallthru
          _
        // Predicated region
        $region33: #{tpu_custom_call.1} parent=11 // pred_check
          %p430 = pneg %p288
        $region34: #{tpu_custom_call.1} parent=11 // pred_check_branch
          %432 = sbr.rel (%p430) target = $region36
        $region35: #{tpu_custom_call.1} parent=11 // pred_region
          _
        $region36: #{tpu_custom_call.1} parent=11 // pred_fallthru
          _
        // Predicated region
        $region37: #{tpu_custom_call.1} parent=11 // pred_check
          %p433 = pneg %p309
        $region38: #{tpu_custom_call.1} parent=11 // pred_check_branch
          %435 = sbr.rel (%p433) target = $region40
        $region39: #{tpu_custom_call.1} parent=11 // pred_region
          _
        $region40: #{tpu_custom_call.1} parent=11 // pred_fallthru
          _
        // Predicated region
        $region41: #{tpu_custom_call.1} parent=11 // pred_check
          %p436 = pneg %p330
        $region42: #{tpu_custom_call.1} parent=11 // pred_check_branch
          %438 = sbr.rel (%p436) target = $region44
        $region43: #{tpu_custom_call.1} parent=11 // pred_region
          %440 = vsyncadd [#allocation9], 0
          %s441 = sshll.u32 %s12, 4
          %s442 = int_to_ptr.hbm [resolvable:$true] %s441
          %s443 = sshll.u32 [#allocation8], 4
          %s444 = int_to_ptr.vmem [resolvable:$true] %s443
          %449 = dma.hbm_to_vmem [thread:$0]  %s442, 64, %s444, [#allocation9], 16, 16, 1
        $region44: #{tpu_custom_call.1} parent=11 // pred_fallthru
          _
      $region12: #{tpu_custom_call.1} parent=5 // pred_fallthru
        _
      %p450 = scmp.lt.s32.totalorder %s32, 8
      // Predicated region
      $region45: #{tpu_custom_call.1} parent=5 // pred_check
        %p451 = pneg %p450
      $region46: #{tpu_custom_call.1} parent=5 // pred_check_branch
        %453 = sbr.rel (%p451) target = $region48
      $region47: #{tpu_custom_call.1} parent=5 // pred_region
        // Predicated region
        $region49: #{tpu_custom_call.1} parent=47 // pred_check
          %p454 = pneg %p52
        $region50: #{tpu_custom_call.1} parent=47 // pred_check_branch
          %456 = sbr.rel (%p454) target = $region52
        $region51: #{tpu_custom_call.1} parent=47 // pred_region
          %p457 = scmp.lt.s32.totalorder %s32, 7
          %s458 = scalar_select %p457, %s32, 7
          %s459 = smul.addr %s458, 8
          %s460 = scalar_lea.vmem %s0, %s459
        $region52: #{tpu_custom_call.1} parent=47 // pred_fallthru
          _
        // Predicated region
        $region53: #{tpu_custom_call.1} parent=47 // pred_check
          %p461 = pneg %p78
        $region54: #{tpu_custom_call.1} parent=47 // pred_check_branch
          %463 = sbr.rel (%p461) target = $region56
        $region55: #{tpu_custom_call.1} parent=47 // pred_region
          %p464 = scmp.lt.s32.totalorder %s32, 7
          %s465 = scalar_select %p464, %s32, 7
          %s466 = smul.addr %s465, 2
          %s467 = smul.addr %s466, 8
          %s468 = scalar_lea.vmem %s1, %s467
        $region56: #{tpu_custom_call.1} parent=47 // pred_fallthru
          _
        // Predicated region
        $region57: #{tpu_custom_call.1} parent=47 // pred_check
          %p469 = pneg %p104
        $region58: #{tpu_custom_call.1} parent=47 // pred_check_branch
          %471 = sbr.rel (%p469) target = $region60
        $region59: #{tpu_custom_call.1} parent=47 // pred_region
          %p472 = scmp.lt.s32.totalorder %s32, 7
          %s473 = scalar_select %p472, %s32, 7
          %s474 = smul.addr %s473, 4
          %s475 = smul.addr %s474, 8
          %s476 = scalar_lea.vmem %s2, %s475
        $region60: #{tpu_custom_call.1} parent=47 // pred_fallthru
          _
        // Predicated region
        $region61: #{tpu_custom_call.1} parent=47 // pred_check
          %p477 = pneg %p130
        $region62: #{tpu_custom_call.1} parent=47 // pred_check_branch
          %479 = sbr.rel (%p477) target = $region64
        $region63: #{tpu_custom_call.1} parent=47 // pred_region
          %p480 = scmp.lt.s32.totalorder %s32, 7
          %s481 = scalar_select %p480, %s32, 7
          %s482 = smul.addr %s481, 8
          %s483 = scalar_lea.vmem %s3, %s482
        $region64: #{tpu_custom_call.1} parent=47 // pred_fallthru
          _
        // Predicated region
        $region65: #{tpu_custom_call.1} parent=47 // pred_check
          %p484 = pneg %p156
        $region66: #{tpu_custom_call.1} parent=47 // pred_check_branch
          %486 = sbr.rel (%p484) target = $region68
        $region67: #{tpu_custom_call.1} parent=47 // pred_region
          %s487 = sand.u32 %s146, 1
          %s488 = scalar_lea.sflag [#allocation3], %s487
          %s489 = sand.u32 %s146, 1
          %s490 = smul.addr %s489, 8
          %s491 = scalar_lea.vmem [#allocation2], %s490
          %493 = vsyncadd %s488, 0
          %s494 = smul.addr %s32, 8
          %s495 = scalar_lea.hbm %s4, %s494
          %s497 = sshll.u32 %s495, 4
          %s498 = int_to_ptr.hbm [resolvable:$true] %s497
          %s499 = sshll.u32 %s491, 4
          %s500 = int_to_ptr.vmem [resolvable:$true] %s499
          %502 = dma.hbm_to_vmem [thread:$0]  %s498, 128, %s500, %s488
        $region68: #{tpu_custom_call.1} parent=47 // pred_fallthru
          _
      $region48: #{tpu_custom_call.1} parent=5 // pred_fallthru
        _
      %p503 = scmp.le.s32.totalorder 1, %s32
      %p504 = scmp.lt.s32.totalorder %s32, 9
      %p505 = pnand %p503, %p504
      %p506 = pneg %p505
      // Predicated region
      $region69: #{tpu_custom_call.1} parent=5 // pred_check
        _
      $region70: #{tpu_custom_call.1} parent=5 // pred_check_branch
        %508 = sbr.rel (%p505) target = $region72
      $region71: #{tpu_custom_call.1} parent=5 // pred_region
        %s509 = ssub.s32 %s32, 1
        %s510 = sand.u32 %s149, 1
        %s511 = scalar_lea.sflag [#allocation3], %s510
        %s512 = sand.u32 %s149, 1
        %s513 = smul.addr %s512, 8
        %s514 = scalar_lea.vmem [#allocation2], %s513
        // Predicated region
        $region73: #{tpu_custom_call.1} parent=71 // pred_check
          %p515 = pneg %p162
        $region74: #{tpu_custom_call.1} parent=71 // pred_check_branch
          %517 = sbr.rel (%p515) target = $region76
        $region75: #{tpu_custom_call.1} parent=71 // pred_region
          %519 = dma.done %s511, 128
        $region76: #{tpu_custom_call.1} parent=71 // pred_fallthru
          _
        // Predicated region
        $region77: #{tpu_custom_call.1} parent=71 // pred_check
          %p520 = pneg %p204
        $region78: #{tpu_custom_call.1} parent=71 // pred_check_branch
          %522 = sbr.rel (%p520) target = $region80
        $region79: #{tpu_custom_call.1} parent=71 // pred_region
          %524 = dma.done [#allocation6], 16
        $region80: #{tpu_custom_call.1} parent=71 // pred_fallthru
          _
        // Predicated region
        $region81: #{tpu_custom_call.1} parent=71 // pred_check
          %p525 = pneg %p246
        $region82: #{tpu_custom_call.1} parent=71 // pred_check_branch
          %527 = sbr.rel (%p525) target = $region84
        $region83: #{tpu_custom_call.1} parent=71 // pred_region
          %529 = dma.done [#allocation6], 16
        $region84: #{tpu_custom_call.1} parent=71 // pred_fallthru
          _
        // Predicated region
        $region85: #{tpu_custom_call.1} parent=71 // pred_check
          %p530 = pneg %p330
        $region86: #{tpu_custom_call.1} parent=71 // pred_check_branch
          %532 = sbr.rel (%p530) target = $region88
        $region87: #{tpu_custom_call.1} parent=71 // pred_region
          %534 = dma.done [#allocation9], 64
        $region88: #{tpu_custom_call.1} parent=71 // pred_fallthru
          _
        %p535 = scmp.lt.s32.totalorder %s37, 7
        %s536 = scalar_select %p535, %s37, 7
        %s537 = smul.addr %s536, 8
        %s538 = scalar_lea.vmem %s0, %s537
        %p539 = pneg %p58
        %p540 = pneg %p55
        %p541 = scmp.lt.s32.totalorder %s37, 7
        %s542 = scalar_select %p541, %s37, 7
        %s543 = smul.addr %s542, 2
        %s544 = smul.addr %s543, 8
        %s545 = scalar_lea.vmem %s1, %s544
        %p546 = pneg %p84
        %p547 = pneg %p81
        %p548 = scmp.lt.s32.totalorder %s37, 7
        %s549 = scalar_select %p548, %s37, 7
        %s550 = smul.addr %s549, 4
        %s551 = smul.addr %s550, 8
        %s552 = scalar_lea.vmem %s2, %s551
        %p553 = pneg %p110
        %p554 = pneg %p107
        %p555 = scmp.lt.s32.totalorder %s37, 7
        %s556 = scalar_select %p555, %s37, 7
        %s557 = smul.addr %s556, 8
        %s558 = scalar_lea.vmem %s3, %s557
        %p559 = pneg %p136
        %p560 = pneg %p133
        %s561 = sand.u32 %s149, 1
        %s562 = scalar_lea.sflag [#allocation3], %s561
        %s563 = sand.u32 %s149, 1
        %s564 = smul.addr %s563, 8
        %s565 = scalar_lea.vmem [#allocation2], %s564
        %p566 = pneg %p162
        %p567 = pneg %p159
        %p568 = pneg %p183
        %p569 = pneg %p180
        %p570 = pneg %p204
        %p571 = pneg %p201
        %p572 = pneg %p225
        %p573 = pneg %p222
        %p574 = pneg %p246
        %p575 = pneg %p243
        %p576 = pneg %p267
        %p577 = pneg %p264
        %p578 = pneg %p288
        %p579 = pneg %p285
        %p580 = pneg %p309
        %p581 = pneg %p306
        %p582 = pneg %p330
        %p583 = pneg %p327
        %p584 = pneg %p356
        %p585 = pneg %p353
        %s586 = sand.u32 %s343, 1
        %s587 = scalar_lea.sflag [#allocation4], %s586
        %s588 = sand.u32 %s343, 1
        %s589 = smul.addr %s588, 8
        %s590 = scalar_lea.vmem [#allocation10], %s589
        %p591 = pneg %p382
        %p592 = pneg %p379
        %s593 = sand.u32 %s369, 1
        %s594 = scalar_lea.sflag [#allocation12], %s593
        %s595 = sand.u32 %s369, 1
        %s596 = smul.addr %s595, 16
        %s597 = scalar_lea.vmem [#allocation11], %s596
        %p598 = scmp.lt.s32.totalorder %s37, 7
        %s599 = scalar_select %p598, %s37, 7
        %s600 = smul.addr %s599, 8
        %s601 = scalar_lea.vmem %s0, %s600
        %p602 = scmp.lt.s32.totalorder %s37, 7
        %s603 = scalar_select %p602, %s37, 7
        %s604 = smul.addr %s603, 2
        %s605 = smul.addr %s604, 8
        %s606 = scalar_lea.vmem %s1, %s605
        %p607 = scmp.lt.s32.totalorder %s37, 7
        %s608 = scalar_select %p607, %s37, 7
        %s609 = smul.addr %s608, 4
        %s610 = smul.addr %s609, 8
        %s611 = scalar_lea.vmem %s2, %s610
        %p612 = scmp.lt.s32.totalorder %s37, 7
        %s613 = scalar_select %p612, %s37, 7
        %s614 = smul.addr %s613, 8
        %s615 = scalar_lea.vmem %s3, %s614
        %v617 = vld [vmem:[%s601] sm:$0xff]
        %v618 = vld [vmem:[%s5] sm:$0xf]
        %v619 = vld [vmem:[%s5 + $0x4] sm:$0xf]
        %v620 = vpack.c.bf16 %v617, %v617
        %v621 = vld [vmem:[#allocation5] sm:$0x1]
        %v623 = vperm.slane %v621, 0
        %v627 = vunpack.c.l.b16 %v618
        %v628 = vunpack.c.l.b16 %v619
        %v629 = vpack.c.b16 %v628, %v627
        %vm631 = vcmask 130048
        %v633 = vsel %vm631, %v620, 0
        %635 = vmatpush.bf16.msra.mxu0 0
        %636 = vmatpush.bf16.msra.mxu0 0
        %637 = vmatpush.bf16.msra.mxu0 0
        %638 = vmatpush.bf16.msra.mxu0 0
        %639 = vmatpush.bf16.msra.mxu0 0
        %640 = vmatpush.bf16.msra.mxu0 0
        %641 = vmatpush.bf16.msra.mxu0 0
        %642 = vmatpush.bf16.msra.mxu0 %v629
        %643 = vmatmul.bf16.gmra.mxu0 %v633
        %v644 = vpop.f32.mrf.mxu0
        %v645 = vadd.f32 %v623, %v644
        %v646 = vpop.f32.mrf.mxu0
        %647 = vdwg.mxu0
        %vm648 = vcmp.gt.f32.partialorder %v645, 0.0
        %v649 = vmul.f32 %v645, 0.01
        %v650 = vsel %vm648, %v645, %v649
        %v651 = vld [vmem:[%s606] sm:$0xff]
        %v652 = vld [vmem:[%s606 + $0x8] sm:$0xff]
        %v653 = vld [vmem:[%s7] sm:$0xf]
        %v654 = vpack.c.bf16 %v652, %v651
        %v655 = vld [vmem:[#allocation7] sm:$0x1]
        %v657 = vperm.slane %v655, 0
        %vm659 = vcmask 64512
        %v661 = vsel %vm659, %v654, 0
        %vm663 = vcmask 1043456
        %v665 = vsel %vm663, %v653, 0
        %667 = vmatpush.bf16.msra.mxu0 0
        %668 = vmatpush.bf16.msra.mxu0 0
        %669 = vmatpush.bf16.msra.mxu0 0
        %670 = vmatpush.bf16.msra.mxu0 0
        %671 = vmatpush.bf16.msra.mxu0 0
        %672 = vmatpush.bf16.msra.mxu0 0
        %673 = vmatpush.bf16.msra.mxu0 0
        %674 = vmatpush.bf16.msra.mxu0 %v665
        %675 = vmatmul.bf16.gmra.mxu0 %v661
        %v676 = vpop.f32.mrf.mxu0
        %v677 = vadd.f32 %v657, %v676
        %v678 = vpop.f32.mrf.mxu0
        %v679 = vadd.f32 %v657, %v678
        %680 = vdwg.mxu0
        %vm681 = vcmp.gt.f32.partialorder %v677, 0.0
        %vm682 = vcmp.gt.f32.partialorder %v679, 0.0
        %v683 = vmul.f32 %v677, 0.01
        %v684 = vmul.f32 %v679, 0.01
        %v685 = vsel %vm681, %v677, %v683
        %v686 = vsel %vm682, %v679, %v684
        %v687 = vpack.c.bf16 %v650, %v650
        %v688 = vlaneseq
        %v689 = vand.u32 %v688, 127
        %v690 = vld [vmem:[%s611] sm:$0xff]
        %v691 = vld [vmem:[%s611 + $0x8] sm:$0xff]
        %v692 = vld [vmem:[%s611 + $0x10] sm:$0xff]
        %v693 = vld [vmem:[%s611 + $0x18] sm:$0xff]
        %694 = vset.pattern.permute.xlu0 0
        %695 = vperm.xlu0 %694, %v690
        %v696 = vpop.permute.xlu0 %695
        %697 = vset.pattern.permute.xlu0 0
        %698 = vperm.xlu0 %697, %v691
        %v699 = vpop.permute.xlu0 %698
        %700 = vset.pattern.permute.xlu0 0
        %701 = vperm.xlu0 %700, %v692
        %v702 = vpop.permute.xlu0 %701
        %703 = vset.pattern.permute.xlu0 0
        %704 = vperm.xlu0 %703, %v693
        %v705 = vpop.permute.xlu0 %704
        %vm706 = vcmp.eq.s32.totalorder %v696, %v689
        %vm707 = vcmp.eq.s32.totalorder %v699, %v689
        %vm708 = vcmp.eq.s32.totalorder %v702, %v689
        %vm709 = vcmp.eq.s32.totalorder %v705, %v689
        %v710 = vsel %vm706, 1.0, 0.0
        %v711 = vsel %vm707, 1.0, 0.0
        %v712 = vsel %vm708, 1.0, 0.0
        %v713 = vsel %vm709, 1.0, 0.0
        %v714 = vpack.c.bf16 %v711, %v710
        %v715 = vpack.c.bf16 %v713, %v712
        %v716 = vld [vmem:[%s615] sm:$0xff]
        %v717 = vld [vmem:[%s514] sm:$0xff]
        %v719 = vsel %vm659, %v714, 0
        %v722 = vsel %vm659, %v715, 0
        %v725 = vsel %vm663, %v687, 0
        %727 = vmatpush.bf16.msra.mxu0 0
        %728 = vmatpush.bf16.msra.mxu0 0
        %729 = vmatpush.bf16.msra.mxu0 0
        %730 = vmatpush.bf16.msra.mxu0 0
        %731 = vmatpush.bf16.msra.mxu0 0
        %732 = vmatpush.bf16.msra.mxu0 0
        %733 = vmatpush.bf16.msra.mxu0 0
        %734 = vmatpush.bf16.msra.mxu0 %v725
        %735 = vmatmul.bf16.gmra.mxu0 %v719
        %v736 = vpop.f32.mrf.mxu0
        %v737 = vadd.f32 0.0, %v736
        %v738 = vpop.f32.mrf.mxu0
        %v739 = vadd.f32 0.0, %v738
        %740 = vmatmul.bf16.gmra.mxu0 %v722
        %v741 = vpop.f32.mrf.mxu0
        %v742 = vadd.f32 0.0, %v741
        %v743 = vpop.f32.mrf.mxu0
        %v744 = vadd.f32 0.0, %v743
        %745 = vdwg.mxu0
        %748 = vrot.lane.b32.xlu0 %v742, 32
        %v749 = vpop.permute.xlu0 %748
        %750 = vrot.lane.b32.xlu0 %v744, 32
        %v751 = vpop.permute.xlu0 %750
        %756 = vrot.lane.b32.xlu0 %v685, 64
        %v757 = vpop.permute.xlu0 %756
        %758 = vrot.lane.b32.xlu0 %v686, 64
        %v759 = vpop.permute.xlu0 %758
        %vm762 = vcmask 261120
        %v763 = vsel %vm762, %v737, %v749
        %v764 = vsel %vm762, %v739, %v751
        %vm765 = vcmask 523264
        %v766 = vsel %vm765, %v763, %v757
        %v767 = vsel %vm765, %v764, %v759
        %v768 = vpack.c.bf16 %v767, %v766
        %v769 = vld [vmem:[%s9] sm:$0xf]
        %v770 = vld [vmem:[%s9 + $0x4] sm:$0xf]
        %v771 = vld [vmem:[%s9 + $0x8] sm:$0xf]
        %v772 = vld [vmem:[%s9 + $0xc] sm:$0xf]
        %v773 = vld [vmem:[%s9 + $0x10] sm:$0xf]
        %v774 = vld [vmem:[%s9 + $0x14] sm:$0xf]
        %v775 = vld [vmem:[%s9 + $0x18] sm:$0xf]
        %v776 = vld [vmem:[%s9 + $0x1c] sm:$0xf]
        %v777 = vld [vmem:[%s9 + $0x20] sm:$0xf]
        %v778 = vld [vmem:[%s9 + $0x24] sm:$0xf]
        %v779 = vld [vmem:[%s9 + $0x28] sm:$0xf]
        %v780 = vld [vmem:[%s9 + $0x2c] sm:$0xf]
        %v781 = vld [vmem:[%s10] sm:$0x1]
        %v783 = vperm.slane %v781, 0
        %v797 = vunpack.c.l.b16 %v769
        %v798 = vunpack.c.l.b16 %v770
        %v799 = vunpack.c.l.b16 %v771
        %v800 = vunpack.c.l.b16 %v772
        %v801 = vunpack.c.l.b16 %v773
        %v802 = vunpack.c.l.b16 %v774
        %v803 = vunpack.c.l.b16 %v775
        %v804 = vunpack.c.l.b16 %v776
        %v805 = vunpack.c.l.b16 %v777
        %v806 = vunpack.c.l.b16 %v778
        %v807 = vunpack.c.l.b16 %v779
        %v808 = vunpack.c.l.b16 %v780
        %v809 = vpack.c.b16 %v798, %v797
        %v810 = vpack.c.b16 %v800, %v799
        %v811 = vpack.c.b16 %v802, %v801
        %v812 = vpack.c.b16 %v804, %v803
        %v813 = vpack.c.b16 %v806, %v805
        %v814 = vpack.c.b16 %v808, %v807
        %vm821 = vcmask 785408
        %v823 = vsel %vm821, %v768, 0
        %825 = vmatpush.bf16.msra.mxu0 0
        %826 = vmatpush.bf16.msra.mxu0 0
        %827 = vmatpush.bf16.msra.mxu0 %v814
        %828 = vmatpush.bf16.msra.mxu0 %v813
        %829 = vmatpush.bf16.msra.mxu0 %v812
        %830 = vmatpush.bf16.msra.mxu0 %v811
        %831 = vmatpush.bf16.msra.mxu0 %v810
        %832 = vmatpush.bf16.msra.mxu0 %v809
        %833 = vmatmul.bf16.gmra.mxu0 %v823
        %v834 = vpop.f32.mrf.mxu0
        %v835 = vadd.f32 %v783, %v834
        %v836 = vpop.f32.mrf.mxu0
        %v837 = vadd.f32 %v783, %v836
        %838 = vdwg.mxu0
        %vm839 = vcmp.gt.f32.partialorder %v835, 0.0
        %vm840 = vcmp.gt.f32.partialorder %v837, 0.0
        %v841 = vmul.f32 %v835, 0.01
        %v842 = vmul.f32 %v837, 0.01
        %v843 = vsel %vm839, %v835, %v841
        %v844 = vsel %vm840, %v837, %v842
        %847 = vrot.lane.b32.xlu0 %v835, 64
        %v848 = vpop.permute.xlu0 %847
        %849 = vrot.lane.b32.xlu0 %v837, 64
        %v850 = vpop.permute.xlu0 %849
        %853 = vxpose.xlu0.b32.start [1/16] %v848, 128
        %854 = vxpose.xlu0.b32.cont [2/16] %v850, 128
        %855 = vxpose.xlu0.b32.cont [3/16] 0.0, 128
        %856 = vxpose.xlu0.b32.cont [4/16] 0.0, 128
        %857 = vxpose.xlu0.b32.cont [5/16] 0.0, 128
        %858 = vxpose.xlu0.b32.cont [6/16] 0.0, 128
        %859 = vxpose.xlu0.b32.cont [7/16] 0.0, 128
        %860 = vxpose.xlu0.b32.cont [8/16] 0.0, 128
        %861 = vxpose.xlu0.b32.cont [9/16] 0.0, 128
        %862 = vxpose.xlu0.b32.cont [10/16] 0.0, 128
        %863 = vxpose.xlu0.b32.cont [11/16] 0.0, 128
        %864 = vxpose.xlu0.b32.cont [12/16] 0.0, 128
        %865 = vxpose.xlu0.b32.cont [13/16] 0.0, 128
        %866 = vxpose.xlu0.b32.cont [14/16] 0.0, 128
        %867 = vxpose.xlu0.b32.cont [15/16] 0.0, 128
        %868 = vxpose.xlu0.b32.end [16/16] 0.0, 128
        %v869 = vpop.trf.xlu0
        %v870 = vpop.trf.xlu0
        %v871 = vpop.trf.xlu0
        %v872 = vpop.trf.xlu0
        %v873 = vpop.trf.xlu0
        %v874 = vpop.trf.xlu0
        %v875 = vpop.trf.xlu0
        %v876 = vpop.trf.xlu0
        %v877 = vpop.trf.xlu0
        %v878 = vpop.trf.xlu0
        %v879 = vpop.trf.xlu0
        %v880 = vpop.trf.xlu0
        %v881 = vpop.trf.xlu0
        %v882 = vpop.trf.xlu0
        %v883 = vpop.trf.xlu0
        %v884 = vpop.trf.xlu0
        %v885 = vperm.slane %v869, 0
        %v886 = vmul.f32 %v716, %v885
        %v887 = vadd.f32 %v886, %v717
        %v888 = vsel %vm631, %v887, -inf
        %889 = vmax.xlane.f32.xlu0 %v888
        %v890 = vpop.xlane.xlu0 %889
        %v891 = vsub.f32 %v887, %v890
        %v892 = vmul.f32 %v891, 1.442695
        %v893 = vpow.pop %v892
        %v894 = vsel %vm631, %v893, 0.0
        %895 = vadd.xlane.f32.xlu0 %v894
        %v896 = vpop.xlane.xlu0 %895
        %v897 = vrcp.pop %v896
        %v898 = vmul.f32 %v896, %v897
        %v899 = vsub.f32 1.0, %v898
        %v900 = vmul.f32 %v897, %v899
        %v901 = vadd.f32 %v897, %v900
        %vm902 = vweird.f32 %v896
        %vm903 = vweird.f32 %v897
        %vm904 = vmor %vm902, %vm903
        %v905 = vsel %vm904, %v897, %v901
        %v906 = vand.u32 2147483647, %v896
        %vm907 = vcmp.eq.f32.partialorder %v906, 8.507059e+37
        %v908 = vand.u32 %v896, 2147483648
        %v909 = vor.u32 1.1754944e-38, %v908
        %v910 = vsel %vm907, %v909, %v905
        %v911 = vmul.f32 %v893, %v910
        %v912 = vpack.c.bf16 %v911, %v911
        %v913 = vpack.c.bf16 %v844, %v843
        %v915 = vsel %vm631, %v912, 0
        %917 = vmatpush.bf16.msra.mxu0 0
        %918 = vmatpush.bf16.msra.mxu0 0
        %919 = vmatpush.bf16.msra.mxu0 0
        %920 = vmatpush.bf16.msra.mxu0 0
        %921 = vmatpush.bf16.msra.mxu0 0
        %922 = vmatpush.bf16.msra.mxu0 0
        %923 = vmatpush.bf16.msra.mxu0 0
        %924 = vmatpush.bf16.msra.mxu0 %v913
        %925 = vmatmul.bf16.gmra.mxu0 %v915
        %v926 = vpop.f32.mrf.mxu0
        %v927 = vadd.f32 0.0, %v926
        %v928 = vpop.f32.mrf.mxu0
        %929 = vdwg.mxu0
        %931 = vrot.lane.b32.xlu0 %v650, 32
        %v932 = vpop.permute.xlu0 %931
        %v934 = vsel %vm762, %v927, %v932
        %v935 = vld [vmem:[%s11] sm:$0xf]
        %v936 = vld [vmem:[%s11 + $0x4] sm:$0xf]
        %v937 = vld [vmem:[%s11 + $0x8] sm:$0xf]
        %v938 = vld [vmem:[%s11 + $0xc] sm:$0xf]
        %v939 = vld [vmem:[%s11 + $0x10] sm:$0xf]
        %v940 = vld [vmem:[%s11 + $0x14] sm:$0xf]
        %v941 = vld [vmem:[%s11 + $0x18] sm:$0xf]
        %v942 = vld [vmem:[%s11 + $0x1c] sm:$0xf]
        %v943 = vpack.c.bf16 %v934, %v934
        %v944 = vld [vmem:[#allocation8] sm:$0x1]
        %v946 = vperm.slane %v944, 0
        %v956 = vunpack.c.l.b16 %v935
        %v957 = vunpack.c.l.b16 %v936
        %v958 = vunpack.c.l.b16 %v937
        %v959 = vunpack.c.l.b16 %v938
        %v960 = vunpack.c.l.b16 %v939
        %v961 = vunpack.c.l.b16 %v940
        %v962 = vunpack.c.l.b16 %v941
        %v963 = vunpack.c.l.b16 %v942
        %v964 = vpack.c.b16 %v957, %v956
        %v965 = vpack.c.b16 %v959, %v958
        %v966 = vpack.c.b16 %v961, %v960
        %v967 = vpack.c.b16 %v963, %v962
        %v973 = vsel %vm765, %v943, 0
        %975 = vmatpush.bf16.msra.mxu0 0
        %976 = vmatpush.bf16.msra.mxu0 0
        %977 = vmatpush.bf16.msra.mxu0 0
        %978 = vmatpush.bf16.msra.mxu0 0
        %979 = vmatpush.bf16.msra.mxu0 %v967
        %980 = vmatpush.bf16.msra.mxu0 %v966
        %981 = vmatpush.bf16.msra.mxu0 %v965
        %982 = vmatpush.bf16.msra.mxu0 %v964
        %983 = vmatmul.bf16.gmra.mxu0 %v973
        %v984 = vpop.f32.mrf.mxu0
        %v985 = vadd.f32 %v946, %v984
        %v986 = vpop.f32.mrf.mxu0
        %987 = vdwg.mxu0
        %v988 = vxor.u32 %v985, 2147483648
        %v989 = vmul.f32 %v988, 1.442695
        %v990 = vpow.pop %v989
        %v991 = vadd.f32 %v990, 1.0
        %v992 = vrcp.pop %v991
        %v993 = vmul.f32 %v991, %v992
        %v994 = vsub.f32 1.0, %v993
        %v995 = vmul.f32 %v992, %v994
        %v996 = vadd.f32 %v992, %v995
        %vm997 = vweird.f32 %v991
        %vm998 = vweird.f32 %v992
        %vm999 = vmor %vm997, %vm998
        %v1000 = vsel %vm999, %v992, %v996
        %v1001 = vand.u32 2147483647, %v991
        %vm1002 = vcmp.eq.f32.partialorder %v1001, 8.507059e+37
        %v1003 = vand.u32 %v991, 2147483648
        %v1004 = vor.u32 1.1754944e-38, %v1003
        %v1005 = vsel %vm1002, %v1004, %v1000
        %v1006 = vmul.f32 1.0, %v1005
        %1008 = vrot.lane.b32.xlu0 %v985, 32
        %v1009 = vpop.permute.xlu0 %1008
        %v1011 = vmul.f32 %v1006, %v1009
        %1013 = vrot.lane.b32.xlu0 %v1011, 64
        %v1014 = vpop.permute.xlu0 %1013
        %v1016 = vadd.f32 %v985, %v1014
        %v1017 = vtanh.pop %v1016
        %v1018 = vsub.f32 1.0, %v1006
        %1020 = vrot.lane.b32.xlu0 %v1017, 96
        %v1021 = vpop.permute.xlu0 %1020
        %v1023 = vmul.f32 %v1018, %v1021
        %v1024 = vmul.f32 %v1006, %v932
        %v1025 = vadd.f32 %v1023, %v1024
        %v1026 = vmax.f32 %v1025, 0.0
        %v1027 = vpack.c.bf16 %v1026, %v1026
        %1029 = vrot.lane.b32.xlu0 %v1027, 96
        %v1030 = vpop.permute.xlu0 %1029
        %v1032 = vsel %vm663, %v1030, 0
        %1034 = vmatpush.bf16.msra.mxu0 0
        %1035 = vmatpush.bf16.msra.mxu0 0
        %1036 = vmatpush.bf16.msra.mxu0 0
        %1037 = vmatpush.bf16.msra.mxu0 0
        %1038 = vmatpush.bf16.msra.mxu0 0
        %1039 = vmatpush.bf16.msra.mxu0 0
        %1040 = vmatpush.bf16.msra.mxu0 0
        %1041 = vmatpush.bf16.msra.mxu0 %v1032
        %1042 = vmatmul.bf16.gmra.mxu0 %v719
        %v1043 = vpop.f32.mrf.mxu0
        %v1044 = vadd.f32 0.0, %v1043
        %v1045 = vpop.f32.mrf.mxu0
        %v1046 = vadd.f32 0.0, %v1045
        %1047 = vmatmul.bf16.gmra.mxu0 %v722
        %v1048 = vpop.f32.mrf.mxu0
        %v1049 = vadd.f32 0.0, %v1048
        %v1050 = vpop.f32.mrf.mxu0
        %v1051 = vadd.f32 0.0, %v1050
        %1052 = vdwg.mxu0
        %1055 = vrot.lane.b32.xlu0 %v1049, 32
        %v1056 = vpop.permute.xlu0 %1055
        %1057 = vrot.lane.b32.xlu0 %v1051, 32
        %v1058 = vpop.permute.xlu0 %1057
        %1063 = vrot.lane.b32.xlu0 %v843, 32
        %v1064 = vpop.permute.xlu0 %1063
        %1065 = vrot.lane.b32.xlu0 %v844, 32
        %v1066 = vpop.permute.xlu0 %1065
        %v1069 = vsel %vm762, %v1044, %v1056
        %v1070 = vsel %vm762, %v1046, %v1058
        %v1071 = vsel %vm765, %v1069, %v1064
        %v1072 = vsel %vm765, %v1070, %v1066
        %v1073 = vpack.c.bf16 %v1072, %v1071
        %s1074 = scalar_lea.vmem %s9, 48
        %v1075 = vld [vmem:[%s1074] sm:$0xf]
        %v1076 = vld [vmem:[%s1074 + $0x4] sm:$0xf]
        %v1077 = vld [vmem:[%s1074 + $0x8] sm:$0xf]
        %v1078 = vld [vmem:[%s1074 + $0xc] sm:$0xf]
        %v1079 = vld [vmem:[%s1074 + $0x10] sm:$0xf]
        %v1080 = vld [vmem:[%s1074 + $0x14] sm:$0xf]
        %v1081 = vld [vmem:[%s1074 + $0x18] sm:$0xf]
        %v1082 = vld [vmem:[%s1074 + $0x1c] sm:$0xf]
        %v1083 = vld [vmem:[%s1074 + $0x20] sm:$0xf]
        %v1084 = vld [vmem:[%s1074 + $0x24] sm:$0xf]
        %v1085 = vld [vmem:[%s1074 + $0x28] sm:$0xf]
        %v1086 = vld [vmem:[%s1074 + $0x2c] sm:$0xf]
        %s1087 = scalar_lea.vmem %s10, 1
        %v1088 = vld [vmem:[%s1087] sm:$0x1]
        %v1090 = vperm.slane %v1088, 0
        %v1104 = vunpack.c.l.b16 %v1075
        %v1105 = vunpack.c.l.b16 %v1076
        %v1106 = vunpack.c.l.b16 %v1077
        %v1107 = vunpack.c.l.b16 %v1078
        %v1108 = vunpack.c.l.b16 %v1079
        %v1109 = vunpack.c.l.b16 %v1080
        %v1110 = vunpack.c.l.b16 %v1081
        %v1111 = vunpack.c.l.b16 %v1082
        %v1112 = vunpack.c.l.b16 %v1083
        %v1113 = vunpack.c.l.b16 %v1084
        %v1114 = vunpack.c.l.b16 %v1085
        %v1115 = vunpack.c.l.b16 %v1086
        %v1116 = vpack.c.b16 %v1105, %v1104
        %v1117 = vpack.c.b16 %v1107, %v1106
        %v1118 = vpack.c.b16 %v1109, %v1108
        %v1119 = vpack.c.b16 %v1111, %v1110
        %v1120 = vpack.c.b16 %v1113, %v1112
        %v1121 = vpack.c.b16 %v1115, %v1114
        %v1129 = vsel %vm821, %v1073, 0
        %1131 = vmatpush.bf16.msra.mxu0 0
        %1132 = vmatpush.bf16.msra.mxu0 0
        %1133 = vmatpush.bf16.msra.mxu0 %v1121
        %1134 = vmatpush.bf16.msra.mxu0 %v1120
        %1135 = vmatpush.bf16.msra.mxu0 %v1119
        %1136 = vmatpush.bf16.msra.mxu0 %v1118
        %1137 = vmatpush.bf16.msra.mxu0 %v1117
        %1138 = vmatpush.bf16.msra.mxu0 %v1116
        %1139 = vmatmul.bf16.gmra.mxu0 %v1129
        %v1140 = vpop.f32.mrf.mxu0
        %v1141 = vadd.f32 %v1090, %v1140
        %v1142 = vpop.f32.mrf.mxu0
        %v1143 = vadd.f32 %v1090, %v1142
        %1144 = vdwg.mxu0
        %vm1145 = vcmp.gt.f32.partialorder %v1141, 0.0
        %vm1146 = vcmp.gt.f32.partialorder %v1143, 0.0
        %v1147 = vmul.f32 %v1141, 0.01
        %v1148 = vmul.f32 %v1143, 0.01
        %v1149 = vsel %vm1145, %v1141, %v1147
        %v1150 = vsel %vm1146, %v1143, %v1148
        %1153 = vrot.lane.b32.xlu0 %v1141, 64
        %v1154 = vpop.permute.xlu0 %1153
        %1155 = vrot.lane.b32.xlu0 %v1143, 64
        %v1156 = vpop.permute.xlu0 %1155
        %1159 = vxpose.xlu0.b32.start [1/16] %v1154, 128
        %1160 = vxpose.xlu0.b32.cont [2/16] %v1156, 128
        %1161 = vxpose.xlu0.b32.cont [3/16] 0.0, 128
        %1162 = vxpose.xlu0.b32.cont [4/16] 0.0, 128
        %1163 = vxpose.xlu0.b32.cont [5/16] 0.0, 128
        %1164 = vxpose.xlu0.b32.cont [6/16] 0.0, 128
        %1165 = vxpose.xlu0.b32.cont [7/16] 0.0, 128
        %1166 = vxpose.xlu0.b32.cont [8/16] 0.0, 128
        %1167 = vxpose.xlu0.b32.cont [9/16] 0.0, 128
        %1168 = vxpose.xlu0.b32.cont [10/16] 0.0, 128
        %1169 = vxpose.xlu0.b32.cont [11/16] 0.0, 128
        %1170 = vxpose.xlu0.b32.cont [12/16] 0.0, 128
        %1171 = vxpose.xlu0.b32.cont [13/16] 0.0, 128
        %1172 = vxpose.xlu0.b32.cont [14/16] 0.0, 128
        %1173 = vxpose.xlu0.b32.cont [15/16] 0.0, 128
        %1174 = vxpose.xlu0.b32.end [16/16] 0.0, 128
        %v1175 = vpop.trf.xlu0
        %v1176 = vpop.trf.xlu0
        %v1177 = vpop.trf.xlu0
        %v1178 = vpop.trf.xlu0
        %v1179 = vpop.trf.xlu0
        %v1180 = vpop.trf.xlu0
        %v1181 = vpop.trf.xlu0
        %v1182 = vpop.trf.xlu0
        %v1183 = vpop.trf.xlu0
        %v1184 = vpop.trf.xlu0
        %v1185 = vpop.trf.xlu0
        %v1186 = vpop.trf.xlu0
        %v1187 = vpop.trf.xlu0
        %v1188 = vpop.trf.xlu0
        %v1189 = vpop.trf.xlu0
        %v1190 = vpop.trf.xlu0
        %v1191 = vperm.slane %v1175, 0
        %v1192 = vmul.f32 %v716, %v1191
        %v1193 = vadd.f32 %v1192, %v717
        %v1194 = vsel %vm631, %v1193, -inf
        %1195 = vmax.xlane.f32.xlu0 %v1194
        %v1196 = vpop.xlane.xlu0 %1195
        %v1197 = vsub.f32 %v1193, %v1196
        %v1198 = vmul.f32 %v1197, 1.442695
        %v1199 = vpow.pop %v1198
        %v1200 = vsel %vm631, %v1199, 0.0
        %1201 = vadd.xlane.f32.xlu0 %v1200
        %v1202 = vpop.xlane.xlu0 %1201
        %v1203 = vrcp.pop %v1202
        %v1204 = vmul.f32 %v1202, %v1203
        %v1205 = vsub.f32 1.0, %v1204
        %v1206 = vmul.f32 %v1203, %v1205
        %v1207 = vadd.f32 %v1203, %v1206
        %vm1208 = vweird.f32 %v1202
        %vm1209 = vweird.f32 %v1203
        %vm1210 = vmor %vm1208, %vm1209
        %v1211 = vsel %vm1210, %v1203, %v1207
        %v1212 = vand.u32 2147483647, %v1202
        %vm1213 = vcmp.eq.f32.partialorder %v1212, 8.507059e+37
        %v1214 = vand.u32 %v1202, 2147483648
        %v1215 = vor.u32 1.1754944e-38, %v1214
        %v1216 = vsel %vm1213, %v1215, %v1211
        %v1217 = vmul.f32 %v1199, %v1216
        %v1218 = vpack.c.bf16 %v1217, %v1217
        %v1219 = vpack.c.bf16 %v1150, %v1149
        %v1221 = vsel %vm631, %v1218, 0
        %1223 = vmatpush.bf16.msra.mxu0 0
        %1224 = vmatpush.bf16.msra.mxu0 0
        %1225 = vmatpush.bf16.msra.mxu0 0
        %1226 = vmatpush.bf16.msra.mxu0 0
        %1227 = vmatpush.bf16.msra.mxu0 0
        %1228 = vmatpush.bf16.msra.mxu0 0
        %1229 = vmatpush.bf16.msra.mxu0 0
        %1230 = vmatpush.bf16.msra.mxu0 %v1219
        %1231 = vmatmul.bf16.gmra.mxu0 %v1221
        %v1232 = vpop.f32.mrf.mxu0
        %v1233 = vadd.f32 0.0, %v1232
        %v1234 = vpop.f32.mrf.mxu0
        %1235 = vdwg.mxu0
        %v1236 = vsel %vm762, %v1233, %v1026
        %s1237 = scalar_lea.vmem %s11, 32
        %v1238 = vld [vmem:[%s1237] sm:$0xf]
        %v1239 = vld [vmem:[%s1237 + $0x4] sm:$0xf]
        %v1240 = vld [vmem:[%s1237 + $0x8] sm:$0xf]
        %v1241 = vld [vmem:[%s1237 + $0xc] sm:$0xf]
        %v1242 = vld [vmem:[%s1237 + $0x10] sm:$0xf]
        %v1243 = vld [vmem:[%s1237 + $0x14] sm:$0xf]
        %v1244 = vld [vmem:[%s1237 + $0x18] sm:$0xf]
        %v1245 = vld [vmem:[%s1237 + $0x1c] sm:$0xf]
        %v1246 = vpack.c.bf16 %v1236, %v1236
        %s1247 = scalar_lea.vmem [#allocation8], 1
        %v1248 = vld [vmem:[%s1247] sm:$0x1]
        %v1250 = vperm.slane %v1248, 0
        %v1260 = vunpack.c.l.b16 %v1238
        %v1261 = vunpack.c.l.b16 %v1239
        %v1262 = vunpack.c.l.b16 %v1240
        %v1263 = vunpack.c.l.b16 %v1241
        %v1264 = vunpack.c.l.b16 %v1242
        %v1265 = vunpack.c.l.b16 %v1243
        %v1266 = vunpack.c.l.b16 %v1244
        %v1267 = vunpack.c.l.b16 %v1245
        %v1268 = vpack.c.b16 %v1261, %v1260
        %v1269 = vpack.c.b16 %v1263, %v1262
        %v1270 = vpack.c.b16 %v1265, %v1264
        %v1271 = vpack.c.b16 %v1267, %v1266
        %v1277 = vsel %vm765, %v1246, 0
        %1279 = vmatpush.bf16.msra.mxu0 0
        %1280 = vmatpush.bf16.msra.mxu0 0
        %1281 = vmatpush.bf16.msra.mxu0 0
        %1282 = vmatpush.bf16.msra.mxu0 0
        %1283 = vmatpush.bf16.msra.mxu0 %v1271
        %1284 = vmatpush.bf16.msra.mxu0 %v1270
        %1285 = vmatpush.bf16.msra.mxu0 %v1269
        %1286 = vmatpush.bf16.msra.mxu0 %v1268
        %1287 = vmatmul.bf16.gmra.mxu0 %v1277
        %v1288 = vpop.f32.mrf.mxu0
        %v1289 = vadd.f32 %v1250, %v1288
        %v1290 = vpop.f32.mrf.mxu0
        %1291 = vdwg.mxu0
        %v1292 = vxor.u32 %v1289, 2147483648
        %v1293 = vmul.f32 %v1292, 1.442695
        %v1294 = vpow.pop %v1293
        %v1295 = vadd.f32 %v1294, 1.0
        %v1296 = vrcp.pop %v1295
        %v1297 = vmul.f32 %v1295, %v1296
        %v1298 = vsub.f32 1.0, %v1297
        %v1299 = vmul.f32 %v1296, %v1298
        %v1300 = vadd.f32 %v1296, %v1299
        %vm1301 = vweird.f32 %v1295
        %vm1302 = vweird.f32 %v1296
        %vm1303 = vmor %vm1301, %vm1302
        %v1304 = vsel %vm1303, %v1296, %v1300
        %v1305 = vand.u32 2147483647, %v1295
        %vm1306 = vcmp.eq.f32.partialorder %v1305, 8.507059e+37
        %v1307 = vand.u32 %v1295, 2147483648
        %v1308 = vor.u32 1.1754944e-38, %v1307
        %v1309 = vsel %vm1306, %v1308, %v1304
        %v1310 = vmul.f32 1.0, %v1309
        %1312 = vrot.lane.b32.xlu0 %v1289, 32
        %v1313 = vpop.permute.xlu0 %1312
        %v1315 = vmul.f32 %v1310, %v1313
        %1317 = vrot.lane.b32.xlu0 %v1315, 64
        %v1318 = vpop.permute.xlu0 %1317
        %v1320 = vadd.f32 %v1289, %v1318
        %v1321 = vtanh.pop %v1320
        %v1322 = vsub.f32 1.0, %v1310
        %1324 = vrot.lane.b32.xlu0 %v1321, 96
        %v1325 = vpop.permute.xlu0 %1324
        %v1327 = vmul.f32 %v1322, %v1325
        %v1328 = vmul.f32 %v1310, %v1026
        %v1329 = vadd.f32 %v1327, %v1328
        %v1330 = vmax.f32 %v1329, 0.0
        %v1331 = vpack.c.bf16 %v1330, %v1330
        %1333 = vrot.lane.b32.xlu0 %v1331, 96
        %v1334 = vpop.permute.xlu0 %1333
        %v1336 = vsel %vm663, %v1334, 0
        %1338 = vmatpush.bf16.msra.mxu0 0
        %1339 = vmatpush.bf16.msra.mxu0 0
        %1340 = vmatpush.bf16.msra.mxu0 0
        %1341 = vmatpush.bf16.msra.mxu0 0
        %1342 = vmatpush.bf16.msra.mxu0 0
        %1343 = vmatpush.bf16.msra.mxu0 0
        %1344 = vmatpush.bf16.msra.mxu0 0
        %1345 = vmatpush.bf16.msra.mxu0 %v1336
        %1346 = vmatmul.bf16.gmra.mxu0 %v719
        %v1347 = vpop.f32.mrf.mxu0
        %v1348 = vadd.f32 0.0, %v1347
        %v1349 = vpop.f32.mrf.mxu0
        %v1350 = vadd.f32 0.0, %v1349
        %1351 = vmatmul.bf16.gmra.mxu0 %v722
        %v1352 = vpop.f32.mrf.mxu0
        %v1353 = vadd.f32 0.0, %v1352
        %v1354 = vpop.f32.mrf.mxu0
        %v1355 = vadd.f32 0.0, %v1354
        %1356 = vdwg.mxu0
        %1359 = vrot.lane.b32.xlu0 %v1353, 32
        %v1360 = vpop.permute.xlu0 %1359
        %1361 = vrot.lane.b32.xlu0 %v1355, 32
        %v1362 = vpop.permute.xlu0 %1361
        %1367 = vrot.lane.b32.xlu0 %v1149, 32
        %v1368 = vpop.permute.xlu0 %1367
        %1369 = vrot.lane.b32.xlu0 %v1150, 32
        %v1370 = vpop.permute.xlu0 %1369
        %v1373 = vsel %vm762, %v1348, %v1360
        %v1374 = vsel %vm762, %v1350, %v1362
        %v1375 = vsel %vm765, %v1373, %v1368
        %v1376 = vsel %vm765, %v1374, %v1370
        %v1377 = vpack.c.bf16 %v1376, %v1375
        %s1378 = scalar_lea.vmem %s9, 96
        %v1379 = vld [vmem:[%s1378] sm:$0xf]
        %v1380 = vld [vmem:[%s1378 + $0x4] sm:$0xf]
        %v1381 = vld [vmem:[%s1378 + $0x8] sm:$0xf]
        %v1382 = vld [vmem:[%s1378 + $0xc] sm:$0xf]
        %v1383 = vld [vmem:[%s1378 + $0x10] sm:$0xf]
        %v1384 = vld [vmem:[%s1378 + $0x14] sm:$0xf]
        %v1385 = vld [vmem:[%s1378 + $0x18] sm:$0xf]
        %v1386 = vld [vmem:[%s1378 + $0x1c] sm:$0xf]
        %v1387 = vld [vmem:[%s1378 + $0x20] sm:$0xf]
        %v1388 = vld [vmem:[%s1378 + $0x24] sm:$0xf]
        %v1389 = vld [vmem:[%s1378 + $0x28] sm:$0xf]
        %v1390 = vld [vmem:[%s1378 + $0x2c] sm:$0xf]
        %s1391 = scalar_lea.vmem %s10, 2
        %v1392 = vld [vmem:[%s1391] sm:$0x1]
        %v1394 = vperm.slane %v1392, 0
        %v1408 = vunpack.c.l.b16 %v1379
        %v1409 = vunpack.c.l.b16 %v1380
        %v1410 = vunpack.c.l.b16 %v1381
        %v1411 = vunpack.c.l.b16 %v1382
        %v1412 = vunpack.c.l.b16 %v1383
        %v1413 = vunpack.c.l.b16 %v1384
        %v1414 = vunpack.c.l.b16 %v1385
        %v1415 = vunpack.c.l.b16 %v1386
        %v1416 = vunpack.c.l.b16 %v1387
        %v1417 = vunpack.c.l.b16 %v1388
        %v1418 = vunpack.c.l.b16 %v1389
        %v1419 = vunpack.c.l.b16 %v1390
        %v1420 = vpack.c.b16 %v1409, %v1408
        %v1421 = vpack.c.b16 %v1411, %v1410
        %v1422 = vpack.c.b16 %v1413, %v1412
        %v1423 = vpack.c.b16 %v1415, %v1414
        %v1424 = vpack.c.b16 %v1417, %v1416
        %v1425 = vpack.c.b16 %v1419, %v1418
        %v1433 = vsel %vm821, %v1377, 0
        %1435 = vmatpush.bf16.msra.mxu0 0
        %1436 = vmatpush.bf16.msra.mxu0 0
        %1437 = vmatpush.bf16.msra.mxu0 %v1425
        %1438 = vmatpush.bf16.msra.mxu0 %v1424
        %1439 = vmatpush.bf16.msra.mxu0 %v1423
        %1440 = vmatpush.bf16.msra.mxu0 %v1422
        %1441 = vmatpush.bf16.msra.mxu0 %v1421
        %1442 = vmatpush.bf16.msra.mxu0 %v1420
        %1443 = vmatmul.bf16.gmra.mxu0 %v1433
        %v1444 = vpop.f32.mrf.mxu0
        %v1445 = vadd.f32 %v1394, %v1444
        %v1446 = vpop.f32.mrf.mxu0
        %v1447 = vadd.f32 %v1394, %v1446
        %1448 = vdwg.mxu0
        %vm1449 = vcmp.gt.f32.partialorder %v1445, 0.0
        %vm1450 = vcmp.gt.f32.partialorder %v1447, 0.0
        %v1451 = vmul.f32 %v1445, 0.01
        %v1452 = vmul.f32 %v1447, 0.01
        %v1453 = vsel %vm1449, %v1445, %v1451
        %v1454 = vsel %vm1450, %v1447, %v1452
        %1457 = vrot.lane.b32.xlu0 %v1445, 64
        %v1458 = vpop.permute.xlu0 %1457
        %1459 = vrot.lane.b32.xlu0 %v1447, 64
        %v1460 = vpop.permute.xlu0 %1459
        %1463 = vxpose.xlu0.b32.start [1/16] %v1458, 128
        %1464 = vxpose.xlu0.b32.cont [2/16] %v1460, 128
        %1465 = vxpose.xlu0.b32.cont [3/16] 0.0, 128
        %1466 = vxpose.xlu0.b32.cont [4/16] 0.0, 128
        %1467 = vxpose.xlu0.b32.cont [5/16] 0.0, 128
        %1468 = vxpose.xlu0.b32.cont [6/16] 0.0, 128
        %1469 = vxpose.xlu0.b32.cont [7/16] 0.0, 128
        %1470 = vxpose.xlu0.b32.cont [8/16] 0.0, 128
        %1471 = vxpose.xlu0.b32.cont [9/16] 0.0, 128
        %1472 = vxpose.xlu0.b32.cont [10/16] 0.0, 128
        %1473 = vxpose.xlu0.b32.cont [11/16] 0.0, 128
        %1474 = vxpose.xlu0.b32.cont [12/16] 0.0, 128
        %1475 = vxpose.xlu0.b32.cont [13/16] 0.0, 128
        %1476 = vxpose.xlu0.b32.cont [14/16] 0.0, 128
        %1477 = vxpose.xlu0.b32.cont [15/16] 0.0, 128
        %1478 = vxpose.xlu0.b32.end [16/16] 0.0, 128
        %v1479 = vpop.trf.xlu0
        %v1480 = vpop.trf.xlu0
        %v1481 = vpop.trf.xlu0
        %v1482 = vpop.trf.xlu0
        %v1483 = vpop.trf.xlu0
        %v1484 = vpop.trf.xlu0
        %v1485 = vpop.trf.xlu0
        %v1486 = vpop.trf.xlu0
        %v1487 = vpop.trf.xlu0
        %v1488 = vpop.trf.xlu0
        %v1489 = vpop.trf.xlu0
        %v1490 = vpop.trf.xlu0
        %v1491 = vpop.trf.xlu0
        %v1492 = vpop.trf.xlu0
        %v1493 = vpop.trf.xlu0
        %v1494 = vpop.trf.xlu0
        %v1495 = vperm.slane %v1479, 0
        %v1496 = vmul.f32 %v716, %v1495
        %v1497 = vadd.f32 %v1496, %v717
        %v1498 = vsel %vm631, %v1497, -inf
        %1499 = vmax.xlane.f32.xlu0 %v1498
        %v1500 = vpop.xlane.xlu0 %1499
        %v1501 = vsub.f32 %v1497, %v1500
        %v1502 = vmul.f32 %v1501, 1.442695
        %v1503 = vpow.pop %v1502
        %v1504 = vsel %vm631, %v1503, 0.0
        %1505 = vadd.xlane.f32.xlu0 %v1504
        %v1506 = vpop.xlane.xlu0 %1505
        %v1507 = vrcp.pop %v1506
        %v1508 = vmul.f32 %v1506, %v1507
        %v1509 = vsub.f32 1.0, %v1508
        %v1510 = vmul.f32 %v1507, %v1509
        %v1511 = vadd.f32 %v1507, %v1510
        %vm1512 = vweird.f32 %v1506
        %vm1513 = vweird.f32 %v1507
        %vm1514 = vmor %vm1512, %vm1513
        %v1515 = vsel %vm1514, %v1507, %v1511
        %v1516 = vand.u32 2147483647, %v1506
        %vm1517 = vcmp.eq.f32.partialorder %v1516, 8.507059e+37
        %v1518 = vand.u32 %v1506, 2147483648
        %v1519 = vor.u32 1.1754944e-38, %v1518
        %v1520 = vsel %vm1517, %v1519, %v1515
        %v1521 = vmul.f32 %v1503, %v1520
        %v1522 = vpack.c.bf16 %v1521, %v1521
        %v1523 = vpack.c.bf16 %v1454, %v1453
        %v1525 = vsel %vm631, %v1522, 0
        %1527 = vmatpush.bf16.msra.mxu0 0
        %1528 = vmatpush.bf16.msra.mxu0 0
        %1529 = vmatpush.bf16.msra.mxu0 0
        %1530 = vmatpush.bf16.msra.mxu0 0
        %1531 = vmatpush.bf16.msra.mxu0 0
        %1532 = vmatpush.bf16.msra.mxu0 0
        %1533 = vmatpush.bf16.msra.mxu0 0
        %1534 = vmatpush.bf16.msra.mxu0 %v1523
        %1535 = vmatmul.bf16.gmra.mxu0 %v1525
        %v1536 = vpop.f32.mrf.mxu0
        %v1537 = vadd.f32 0.0, %v1536
        %v1538 = vpop.f32.mrf.mxu0
        %1539 = vdwg.mxu0
        %v1540 = vsel %vm762, %v1537, %v1330
        %s1541 = scalar_lea.vmem %s11, 64
        %v1542 = vld [vmem:[%s1541] sm:$0xf]
        %v1543 = vld [vmem:[%s1541 + $0x4] sm:$0xf]
        %v1544 = vld [vmem:[%s1541 + $0x8] sm:$0xf]
        %v1545 = vld [vmem:[%s1541 + $0xc] sm:$0xf]
        %v1546 = vld [vmem:[%s1541 + $0x10] sm:$0xf]
        %v1547 = vld [vmem:[%s1541 + $0x14] sm:$0xf]
        %v1548 = vld [vmem:[%s1541 + $0x18] sm:$0xf]
        %v1549 = vld [vmem:[%s1541 + $0x1c] sm:$0xf]
        %v1550 = vpack.c.bf16 %v1540, %v1540
        %s1551 = scalar_lea.vmem [#allocation8], 2
        %v1552 = vld [vmem:[%s1551] sm:$0x1]
        %v1554 = vperm.slane %v1552, 0
        %v1564 = vunpack.c.l.b16 %v1542
        %v1565 = vunpack.c.l.b16 %v1543
        %v1566 = vunpack.c.l.b16 %v1544
        %v1567 = vunpack.c.l.b16 %v1545
        %v1568 = vunpack.c.l.b16 %v1546
        %v1569 = vunpack.c.l.b16 %v1547
        %v1570 = vunpack.c.l.b16 %v1548
        %v1571 = vunpack.c.l.b16 %v1549
        %v1572 = vpack.c.b16 %v1565, %v1564
        %v1573 = vpack.c.b16 %v1567, %v1566
        %v1574 = vpack.c.b16 %v1569, %v1568
        %v1575 = vpack.c.b16 %v1571, %v1570
        %v1581 = vsel %vm765, %v1550, 0
        %1583 = vmatpush.bf16.msra.mxu0 0
        %1584 = vmatpush.bf16.msra.mxu0 0
        %1585 = vmatpush.bf16.msra.mxu0 0
        %1586 = vmatpush.bf16.msra.mxu0 0
        %1587 = vmatpush.bf16.msra.mxu0 %v1575
        %1588 = vmatpush.bf16.msra.mxu0 %v1574
        %1589 = vmatpush.bf16.msra.mxu0 %v1573
        %1590 = vmatpush.bf16.msra.mxu0 %v1572
        %1591 = vmatmul.bf16.gmra.mxu0 %v1581
        %v1592 = vpop.f32.mrf.mxu0
        %v1593 = vadd.f32 %v1554, %v1592
        %v1594 = vpop.f32.mrf.mxu0
        %1595 = vdwg.mxu0
        %v1596 = vxor.u32 %v1593, 2147483648
        %v1597 = vmul.f32 %v1596, 1.442695
        %v1598 = vpow.pop %v1597
        %v1599 = vadd.f32 %v1598, 1.0
        %v1600 = vrcp.pop %v1599
        %v1601 = vmul.f32 %v1599, %v1600
        %v1602 = vsub.f32 1.0, %v1601
        %v1603 = vmul.f32 %v1600, %v1602
        %v1604 = vadd.f32 %v1600, %v1603
        %vm1605 = vweird.f32 %v1599
        %vm1606 = vweird.f32 %v1600
        %vm1607 = vmor %vm1605, %vm1606
        %v1608 = vsel %vm1607, %v1600, %v1604
        %v1609 = vand.u32 2147483647, %v1599
        %vm1610 = vcmp.eq.f32.partialorder %v1609, 8.507059e+37
        %v1611 = vand.u32 %v1599, 2147483648
        %v1612 = vor.u32 1.1754944e-38, %v1611
        %v1613 = vsel %vm1610, %v1612, %v1608
        %v1614 = vmul.f32 1.0, %v1613
        %1616 = vrot.lane.b32.xlu0 %v1593, 32
        %v1617 = vpop.permute.xlu0 %1616
        %v1619 = vmul.f32 %v1614, %v1617
        %1621 = vrot.lane.b32.xlu0 %v1619, 64
        %v1622 = vpop.permute.xlu0 %1621
        %v1624 = vadd.f32 %v1593, %v1622
        %v1625 = vtanh.pop %v1624
        %v1626 = vsub.f32 1.0, %v1614
        %1628 = vrot.lane.b32.xlu0 %v1625, 96
        %v1629 = vpop.permute.xlu0 %1628
        %v1631 = vmul.f32 %v1626, %v1629
        %v1632 = vmul.f32 %v1614, %v1330
        %v1633 = vadd.f32 %v1631, %v1632
        %v1634 = vmax.f32 %v1633, 0.0
        %v1635 = vpack.c.bf16 %v1634, %v1634
        %1637 = vrot.lane.b32.xlu0 %v1635, 96
        %v1638 = vpop.permute.xlu0 %1637
        %v1640 = vsel %vm663, %v1638, 0
        %1642 = vmatpush.bf16.msra.mxu0 0
        %1643 = vmatpush.bf16.msra.mxu0 0
        %1644 = vmatpush.bf16.msra.mxu0 0
        %1645 = vmatpush.bf16.msra.mxu0 0
        %1646 = vmatpush.bf16.msra.mxu0 0
        %1647 = vmatpush.bf16.msra.mxu0 0
        %1648 = vmatpush.bf16.msra.mxu0 0
        %1649 = vmatpush.bf16.msra.mxu0 %v1640
        %1650 = vmatmul.bf16.gmra.mxu0 %v719
        %v1651 = vpop.f32.mrf.mxu0
        %v1652 = vadd.f32 0.0, %v1651
        %v1653 = vpop.f32.mrf.mxu0
        %v1654 = vadd.f32 0.0, %v1653
        %1655 = vmatmul.bf16.gmra.mxu0 %v722
        %v1656 = vpop.f32.mrf.mxu0
        %v1657 = vadd.f32 0.0, %v1656
        %v1658 = vpop.f32.mrf.mxu0
        %v1659 = vadd.f32 0.0, %v1658
        %1660 = vdwg.mxu0
        %1663 = vrot.lane.b32.xlu0 %v1657, 32
        %v1664 = vpop.permute.xlu0 %1663
        %1665 = vrot.lane.b32.xlu0 %v1659, 32
        %v1666 = vpop.permute.xlu0 %1665
        %1671 = vrot.lane.b32.xlu0 %v1453, 32
        %v1672 = vpop.permute.xlu0 %1671
        %1673 = vrot.lane.b32.xlu0 %v1454, 32
        %v1674 = vpop.permute.xlu0 %1673
        %v1677 = vsel %vm762, %v1652, %v1664
        %v1678 = vsel %vm762, %v1654, %v1666
        %v1679 = vsel %vm765, %v1677, %v1672
        %v1680 = vsel %vm765, %v1678, %v1674
        %v1681 = vpack.c.bf16 %v1680, %v1679
        %s1682 = scalar_lea.vmem %s9, 144
        %v1683 = vld [vmem:[%s1682] sm:$0xf]
        %v1684 = vld [vmem:[%s1682 + $0x4] sm:$0xf]
        %v1685 = vld [vmem:[%s1682 + $0x8] sm:$0xf]
        %v1686 = vld [vmem:[%s1682 + $0xc] sm:$0xf]
        %v1687 = vld [vmem:[%s1682 + $0x10] sm:$0xf]
        %v1688 = vld [vmem:[%s1682 + $0x14] sm:$0xf]
        %v1689 = vld [vmem:[%s1682 + $0x18] sm:$0xf]
        %v1690 = vld [vmem:[%s1682 + $0x1c] sm:$0xf]
        %v1691 = vld [vmem:[%s1682 + $0x20] sm:$0xf]
        %v1692 = vld [vmem:[%s1682 + $0x24] sm:$0xf]
        %v1693 = vld [vmem:[%s1682 + $0x28] sm:$0xf]
        %v1694 = vld [vmem:[%s1682 + $0x2c] sm:$0xf]
        %s1695 = scalar_lea.vmem %s10, 3
        %v1696 = vld [vmem:[%s1695] sm:$0x1]
        %v1698 = vperm.slane %v1696, 0
        %v1712 = vunpack.c.l.b16 %v1683
        %v1713 = vunpack.c.l.b16 %v1684
        %v1714 = vunpack.c.l.b16 %v1685
        %v1715 = vunpack.c.l.b16 %v1686
        %v1716 = vunpack.c.l.b16 %v1687
        %v1717 = vunpack.c.l.b16 %v1688
        %v1718 = vunpack.c.l.b16 %v1689
        %v1719 = vunpack.c.l.b16 %v1690
        %v1720 = vunpack.c.l.b16 %v1691
        %v1721 = vunpack.c.l.b16 %v1692
        %v1722 = vunpack.c.l.b16 %v1693
        %v1723 = vunpack.c.l.b16 %v1694
        %v1724 = vpack.c.b16 %v1713, %v1712
        %v1725 = vpack.c.b16 %v1715, %v1714
        %v1726 = vpack.c.b16 %v1717, %v1716
        %v1727 = vpack.c.b16 %v1719, %v1718
        %v1728 = vpack.c.b16 %v1721, %v1720
        %v1729 = vpack.c.b16 %v1723, %v1722
        %v1737 = vsel %vm821, %v1681, 0
        %1739 = vmatpush.bf16.msra.mxu0 0
        %1740 = vmatpush.bf16.msra.mxu0 0
        %1741 = vmatpush.bf16.msra.mxu0 %v1729
        %1742 = vmatpush.bf16.msra.mxu0 %v1728
        %1743 = vmatpush.bf16.msra.mxu0 %v1727
        %1744 = vmatpush.bf16.msra.mxu0 %v1726
        %1745 = vmatpush.bf16.msra.mxu0 %v1725
        %1746 = vmatpush.bf16.msra.mxu0 %v1724
        %1747 = vmatmul.bf16.gmra.mxu0 %v1737
        %v1748 = vpop.f32.mrf.mxu0
        %v1749 = vadd.f32 %v1698, %v1748
        %v1750 = vpop.f32.mrf.mxu0
        %v1751 = vadd.f32 %v1698, %v1750
        %1752 = vdwg.mxu0
        %vm1753 = vcmp.gt.f32.partialorder %v1749, 0.0
        %vm1754 = vcmp.gt.f32.partialorder %v1751, 0.0
        %v1755 = vmul.f32 %v1749, 0.01
        %v1756 = vmul.f32 %v1751, 0.01
        %v1757 = vsel %vm1753, %v1749, %v1755
        %v1758 = vsel %vm1754, %v1751, %v1756
        %1761 = vrot.lane.b32.xlu0 %v1749, 64
        %v1762 = vpop.permute.xlu0 %1761
        %1763 = vrot.lane.b32.xlu0 %v1751, 64
        %v1764 = vpop.permute.xlu0 %1763
        %1767 = vxpose.xlu0.b32.start [1/16] %v1762, 128
        %1768 = vxpose.xlu0.b32.cont [2/16] %v1764, 128
        %1769 = vxpose.xlu0.b32.cont [3/16] 0.0, 128
        %1770 = vxpose.xlu0.b32.cont [4/16] 0.0, 128
        %1771 = vxpose.xlu0.b32.cont [5/16] 0.0, 128
        %1772 = vxpose.xlu0.b32.cont [6/16] 0.0, 128
        %1773 = vxpose.xlu0.b32.cont [7/16] 0.0, 128
        %1774 = vxpose.xlu0.b32.cont [8/16] 0.0, 128
        %1775 = vxpose.xlu0.b32.cont [9/16] 0.0, 128
        %1776 = vxpose.xlu0.b32.cont [10/16] 0.0, 128
        %1777 = vxpose.xlu0.b32.cont [11/16] 0.0, 128
        %1778 = vxpose.xlu0.b32.cont [12/16] 0.0, 128
        %1779 = vxpose.xlu0.b32.cont [13/16] 0.0, 128
        %1780 = vxpose.xlu0.b32.cont [14/16] 0.0, 128
        %1781 = vxpose.xlu0.b32.cont [15/16] 0.0, 128
        %1782 = vxpose.xlu0.b32.end [16/16] 0.0, 128
        %v1783 = vpop.trf.xlu0
        %v1784 = vpop.trf.xlu0
        %v1785 = vpop.trf.xlu0
        %v1786 = vpop.trf.xlu0
        %v1787 = vpop.trf.xlu0
        %v1788 = vpop.trf.xlu0
        %v1789 = vpop.trf.xlu0
        %v1790 = vpop.trf.xlu0
        %v1791 = vpop.trf.xlu0
        %v1792 = vpop.trf.xlu0
        %v1793 = vpop.trf.xlu0
        %v1794 = vpop.trf.xlu0
        %v1795 = vpop.trf.xlu0
        %v1796 = vpop.trf.xlu0
        %v1797 = vpop.trf.xlu0
        %v1798 = vpop.trf.xlu0
        %v1799 = vperm.slane %v1783, 0
        %v1800 = vmul.f32 %v716, %v1799
        %v1801 = vadd.f32 %v1800, %v717
        %v1802 = vsel %vm631, %v1801, -inf
        %1803 = vmax.xlane.f32.xlu0 %v1802
        %v1804 = vpop.xlane.xlu0 %1803
        %v1805 = vsub.f32 %v1801, %v1804
        %v1806 = vmul.f32 %v1805, 1.442695
        %v1807 = vpow.pop %v1806
        %v1808 = vsel %vm631, %v1807, 0.0
        %1809 = vadd.xlane.f32.xlu0 %v1808
        %v1810 = vpop.xlane.xlu0 %1809
        %v1811 = vrcp.pop %v1810
        %v1812 = vmul.f32 %v1810, %v1811
        %v1813 = vsub.f32 1.0, %v1812
        %v1814 = vmul.f32 %v1811, %v1813
        %v1815 = vadd.f32 %v1811, %v1814
        %vm1816 = vweird.f32 %v1810
        %vm1817 = vweird.f32 %v1811
        %vm1818 = vmor %vm1816, %vm1817
        %v1819 = vsel %vm1818, %v1811, %v1815
        %v1820 = vand.u32 2147483647, %v1810
        %vm1821 = vcmp.eq.f32.partialorder %v1820, 8.507059e+37
        %v1822 = vand.u32 %v1810, 2147483648
        %v1823 = vor.u32 1.1754944e-38, %v1822
        %v1824 = vsel %vm1821, %v1823, %v1819
        %v1825 = vmul.f32 %v1807, %v1824
        %v1826 = vpack.c.bf16 %v1825, %v1825
        %v1827 = vpack.c.bf16 %v1758, %v1757
        %v1829 = vsel %vm631, %v1826, 0
        %1831 = vmatpush.bf16.msra.mxu0 0
        %1832 = vmatpush.bf16.msra.mxu0 0
        %1833 = vmatpush.bf16.msra.mxu0 0
        %1834 = vmatpush.bf16.msra.mxu0 0
        %1835 = vmatpush.bf16.msra.mxu0 0
        %1836 = vmatpush.bf16.msra.mxu0 0
        %1837 = vmatpush.bf16.msra.mxu0 0
        %1838 = vmatpush.bf16.msra.mxu0 %v1827
        %1839 = vmatmul.bf16.gmra.mxu0 %v1829
        %v1840 = vpop.f32.mrf.mxu0
        %v1841 = vadd.f32 0.0, %v1840
        %v1842 = vpop.f32.mrf.mxu0
        %1843 = vdwg.mxu0
        %v1844 = vsel %vm762, %v1841, %v1634
        %s1845 = scalar_lea.vmem %s11, 96
        %v1846 = vld [vmem:[%s1845] sm:$0xf]
        %v1847 = vld [vmem:[%s1845 + $0x4] sm:$0xf]
        %v1848 = vld [vmem:[%s1845 + $0x8] sm:$0xf]
        %v1849 = vld [vmem:[%s1845 + $0xc] sm:$0xf]
        %v1850 = vld [vmem:[%s1845 + $0x10] sm:$0xf]
        %v1851 = vld [vmem:[%s1845 + $0x14] sm:$0xf]
        %v1852 = vld [vmem:[%s1845 + $0x18] sm:$0xf]
        %v1853 = vld [vmem:[%s1845 + $0x1c] sm:$0xf]
        %v1854 = vpack.c.bf16 %v1844, %v1844
        %s1855 = scalar_lea.vmem [#allocation8], 3
        %v1856 = vld [vmem:[%s1855] sm:$0x1]
        %v1858 = vperm.slane %v1856, 0
        %v1868 = vunpack.c.l.b16 %v1846
        %v1869 = vunpack.c.l.b16 %v1847
        %v1870 = vunpack.c.l.b16 %v1848
        %v1871 = vunpack.c.l.b16 %v1849
        %v1872 = vunpack.c.l.b16 %v1850
        %v1873 = vunpack.c.l.b16 %v1851
        %v1874 = vunpack.c.l.b16 %v1852
        %v1875 = vunpack.c.l.b16 %v1853
        %v1876 = vpack.c.b16 %v1869, %v1868
        %v1877 = vpack.c.b16 %v1871, %v1870
        %v1878 = vpack.c.b16 %v1873, %v1872
        %v1879 = vpack.c.b16 %v1875, %v1874
        %v1885 = vsel %vm765, %v1854, 0
        %1887 = vmatpush.bf16.msra.mxu0 0
        %1888 = vmatpush.bf16.msra.mxu0 0
        %1889 = vmatpush.bf16.msra.mxu0 0
        %1890 = vmatpush.bf16.msra.mxu0 0
        %1891 = vmatpush.bf16.msra.mxu0 %v1879
        %1892 = vmatpush.bf16.msra.mxu0 %v1878
        %1893 = vmatpush.bf16.msra.mxu0 %v1877
        %1894 = vmatpush.bf16.msra.mxu0 %v1876
        %1895 = vmatmul.bf16.gmra.mxu0 %v1885
        %v1896 = vpop.f32.mrf.mxu0
        %v1897 = vadd.f32 %v1858, %v1896
        %v1898 = vpop.f32.mrf.mxu0
        %1899 = vdwg.mxu0
        %v1900 = vxor.u32 %v1897, 2147483648
        %v1901 = vmul.f32 %v1900, 1.442695
        %v1902 = vpow.pop %v1901
        %v1903 = vadd.f32 %v1902, 1.0
        %v1904 = vrcp.pop %v1903
        %v1905 = vmul.f32 %v1903, %v1904
        %v1906 = vsub.f32 1.0, %v1905
        %v1907 = vmul.f32 %v1904, %v1906
        %v1908 = vadd.f32 %v1904, %v1907
        %vm1909 = vweird.f32 %v1903
        %vm1910 = vweird.f32 %v1904
        %vm1911 = vmor %vm1909, %vm1910
        %v1912 = vsel %vm1911, %v1904, %v1908
        %v1913 = vand.u32 2147483647, %v1903
        %vm1914 = vcmp.eq.f32.partialorder %v1913, 8.507059e+37
        %v1915 = vand.u32 %v1903, 2147483648
        %v1916 = vor.u32 1.1754944e-38, %v1915
        %v1917 = vsel %vm1914, %v1916, %v1912
        %v1918 = vmul.f32 1.0, %v1917
        %1920 = vrot.lane.b32.xlu0 %v1897, 32
        %v1921 = vpop.permute.xlu0 %1920
        %v1923 = vmul.f32 %v1918, %v1921
        %1925 = vrot.lane.b32.xlu0 %v1923, 64
        %v1926 = vpop.permute.xlu0 %1925
        %v1928 = vadd.f32 %v1897, %v1926
        %v1929 = vtanh.pop %v1928
        %v1930 = vsub.f32 1.0, %v1918
        %1932 = vrot.lane.b32.xlu0 %v1929, 96
        %v1933 = vpop.permute.xlu0 %1932
        %v1935 = vmul.f32 %v1930, %v1933
        %v1936 = vmul.f32 %v1918, %v1634
        %v1937 = vadd.f32 %v1935, %v1936
        %1939 = vrot.lane.b32.xlu0 %v1937, 96
        %v1940 = vpop.permute.xlu0 %1939
        %1942 = vst.msk [vmem:[%s590] sm:$0xff] %vm762, %v1940
        %1945 = vrot.lane.b32.xlu0 %v1757, 96
        %v1946 = vpop.permute.xlu0 %1945
        %1947 = vrot.lane.b32.xlu0 %v1758, 96
        %v1948 = vpop.permute.xlu0 %1947
        %1951 = vst.msk [vmem:[%s597] sm:$0xff] %vm762, %v1946
        %1952 = vst.msk [vmem:[%s597 + $0x8] sm:$0xff] %vm762, %v1948
        %s1953 = sand.u32 %s343, 1
        %s1954 = scalar_lea.sflag [#allocation4], %s1953
        %s1955 = sand.u32 %s343, 1
        %s1956 = smul.addr %s1955, 8
        %s1957 = scalar_lea.vmem [#allocation10], %s1956
        %s1958 = sand.u32 %s369, 1
        %s1959 = scalar_lea.sflag [#allocation12], %s1958
        %s1960 = sand.u32 %s369, 1
        %s1961 = smul.addr %s1960, 16
        %s1962 = scalar_lea.vmem [#allocation11], %s1961
        // Predicated region
        $region89: #{tpu_custom_call.1} parent=71 // pred_check
          %p1963 = pneg %p353
        $region90: #{tpu_custom_call.1} parent=71 // pred_check_branch
          %1965 = sbr.rel (%p1963) target = $region92
        $region91: #{tpu_custom_call.1} parent=71 // pred_region
          %1967 = vsyncadd %s1954, 0
          %s1968 = smul.addr %s37, 8
          %s1969 = scalar_lea.hbm %s13, %s1968
          %s1971 = sshll.u32 %s1957, 4
          %s1972 = int_to_ptr.vmem [resolvable:$true] %s1971
          %s1973 = sshll.u32 %s1969, 4
          %s1974 = int_to_ptr.hbm [resolvable:$true] %s1973
          %1976 = dma.vmem_to_hbm [thread:$0]  %s1972, 128, %s1974, %s1954
        $region92: #{tpu_custom_call.1} parent=71 // pred_fallthru
          _
        // Predicated region
        $region93: #{tpu_custom_call.1} parent=71 // pred_check
          %p1977 = pneg %p379
        $region94: #{tpu_custom_call.1} parent=71 // pred_check_branch
          %1979 = sbr.rel (%p1977) target = $region96
        $region95: #{tpu_custom_call.1} parent=71 // pred_region
          %1981 = vsyncadd %s1959, 0
          %s1982 = smul.addr %s37, 2
          %s1983 = smul.addr %s1982, 8
          %s1984 = scalar_lea.hbm %s14, %s1983
          %s1985 = sshll.u32 %s1962, 4
          %s1986 = int_to_ptr.vmem [resolvable:$true] %s1985
          %s1987 = sshll.u32 %s1984, 4
          %s1988 = int_to_ptr.hbm [resolvable:$true] %s1987
          %1993 = dma.vmem_to_hbm [thread:$0]  %s1986, 256, %s1988, %s1959, 128, 128, 8
        $region96: #{tpu_custom_call.1} parent=71 // pred_fallthru
          _
      $region72: #{tpu_custom_call.1} parent=5 // pred_fallthru
        _
      %p1994 = scmp.le.s32.totalorder 2, %s32
      // Predicated region
      $region97: #{tpu_custom_call.1} parent=5 // pred_check
        %p1995 = pneg %p1994
      $region98: #{tpu_custom_call.1} parent=5 // pred_check_branch
        %1997 = sbr.rel (%p1995) target = $region100
      $region99: #{tpu_custom_call.1} parent=5 // pred_region
        %s1998 = ssub.s32 %s32, 2
        // Predicated region
        $region101: #{tpu_custom_call.1} parent=99 // pred_check
          %p1999 = pneg %p359
        $region102: #{tpu_custom_call.1} parent=99 // pred_check_branch
          %2001 = sbr.rel (%p1999) target = $region104
        $region103: #{tpu_custom_call.1} parent=99 // pred_region
          %s2002 = sand.u32 %s344, 1
          %s2003 = scalar_lea.sflag [#allocation4], %s2002
          %s2004 = sand.u32 %s344, 1
          %s2005 = smul.addr %s2004, 8
          %s2006 = scalar_lea.vmem [#allocation10], %s2005
          %2008 = dma.done %s2003, 128
        $region104: #{tpu_custom_call.1} parent=99 // pred_fallthru
          _
        // Predicated region
        $region105: #{tpu_custom_call.1} parent=99 // pred_check
          %p2009 = pneg %p385
        $region106: #{tpu_custom_call.1} parent=99 // pred_check_branch
          %2011 = sbr.rel (%p2009) target = $region108
        $region107: #{tpu_custom_call.1} parent=99 // pred_region
          %s2012 = sand.u32 %s370, 1
          %s2013 = scalar_lea.sflag [#allocation12], %s2012
          %s2014 = sand.u32 %s370, 1
          %s2015 = smul.addr %s2014, 16
          %s2016 = scalar_lea.vmem [#allocation11], %s2015
          %2018 = dma.done %s2013, 256
        $region108: #{tpu_custom_call.1} parent=99 // pred_fallthru
          _
      $region100: #{tpu_custom_call.1} parent=5 // pred_fallthru
        _
    $region6: #{tpu_custom_call.1} parent=1 // loop_footer
      %s36 = sadd.s32 1, %s32
    $region7: #{tpu_custom_call.1} parent=1 // loop_footer_branch
      %31 = sbr.rel target = $region3
    $region8: #{tpu_custom_call.1} parent=1 // loop_exit
      _
    %2019 = vsyncpa [#allocation3], 1
    %s2020 = scalar_lea.sflag [#allocation3], 1
    %2021 = vsyncpa %s2020, 1
    %2022 = vsyncpa [#allocation6], 1
    %2023 = vsyncpa [#allocation9], 1
    %2024 = vsyncpa [#allocation4], 1
    %s2025 = scalar_lea.sflag [#allocation4], 1
    %2026 = vsyncpa %s2025, 1
    %2027 = vsyncpa [#allocation12], 1
    %s2028 = scalar_lea.sflag [#allocation12], 1
    %2029 = vsyncpa %s2028, 1

</llo_original>
